<compile_context>
chip_gen: v5e
topology: v5e:2x2
jax: 0.10.0
libtpu: 0.0.40
codegen_flags: <defaults>
</compile_context>

<pallas_src>
import functools

import jax
import jax.numpy as jnp
from jax.experimental import pallas as pl
from jax.experimental.pallas import tpu as pltpu


def _round_up(n, m):
    return ((n + m - 1) // m) * m


def _pick_batch_tile(B):
    # Aim for >= 2 grid steps so the "parallel" batch axis can shard across
    # v7x's two TensorCores; 256-row tiles feed the full v6e/v7x MXU width.
    # (v5e MXU is 128-wide; 256-row tiles are just two passes there, still
    # fine, and the explicit vmem_limit_bytes keeps its 16 MiB default from
    # constraining the pipeline.)
    if B >= 512:
        return 256
    if B >= 16:
        return _round_up(pl.cdiv(B, 2), 8)
    return _round_up(max(B, 1), 8)


def _lthnet_kernel(dynamic_meta_embedding, *refs):
    """Fused LTHNet head for one batch tile.

    Output slab layout (lane dense, all offsets 128-aligned):
      out[:, 0:F]          direct_feature
      out[:, F:F+Lp]       hash_codes   (columns L..Lp-1 are exact zeros)
      out[:, F+Lp:F+Lp+Kp] assignments  (columns K..Kp-1 are exact zeros)
    """
    if dynamic_meta_embedding:
        (x_ref, proto_ref, w_stem_ref, b_stem_ref, w_fc_ref, b_fc_ref,
         w_halsel_ref, b_halsel_ref, w_hash_ref, b_hash_ref,
         w_cls_ref, b_cls_ref, out_ref) = refs
    else:
        (x_ref, w_stem_ref, b_stem_ref, w_fc_ref, b_fc_ref,
         w_hash_ref, b_hash_ref, w_cls_ref, b_cls_ref, out_ref) = refs

    f32, bf16 = jnp.float32, jnp.bfloat16
    F = w_fc_ref.shape[1]
    Lp = w_hash_ref.shape[1]

    # ---- backbone stand-in: in-kernel GAP (XLU reduction, f32) then
    # linear(C->512) + ReLU.  x tile arrives as f32 [TB, C, HW].
    pooled = jnp.mean(x_ref[...], axis=-1)                       # [TB, C] f32
    feat = jnp.dot(pooled.astype(bf16), w_stem_ref[...],
                   preferred_element_type=f32) + b_stem_ref[...]
    feat = jnp.maximum(feat, 0.0)

    # ---- self.fc ; ReLU ; direct_feature -------------------------------
    h = jnp.dot(feat.astype(bf16), w_fc_ref[...],
                preferred_element_type=f32) + b_fc_ref[...]
    h = jnp.maximum(h, 0.0)
    out_ref[:, 0:F] = h                       # 128-aligned, unmasked store

    if dynamic_meta_embedding:
        # fc_selector and fc_hallucinator fused into one matmul:
        #   fused[:, :F] -> selector pre-activation, fused[:, F:] -> logits
        fused = jnp.dot(h.astype(bf16), w_halsel_ref[...],
                        preferred_element_type=f32) + b_halsel_ref[...]
        sel = jnp.tanh(fused[:, :F])
        att = fused[:, F:]
        att = jnp.exp(att - jnp.max(att, axis=1, keepdims=True))
        # Internal attention softmax: approx reciprocal rides the EUP slot.
        att = att * pl.reciprocal(jnp.sum(att, axis=1, keepdims=True),
                                  approx=True)
        memory = jnp.dot(att.astype(bf16), proto_ref[...],
                         preferred_element_type=f32)
        x_meta = h + sel * memory
    else:
        x_meta = h

    # hash_codes = tanh(hash_layer(x_meta)); padded columns have zero
    # weight/bias -> tanh(0) = 0, sliced off by the wrapper.
    hc = jnp.tanh(jnp.dot(x_meta.astype(bf16), w_hash_ref[...],
                          preferred_element_type=f32) + b_hash_ref[...])
    out_ref[:, F:F + Lp] = hc                 # 128-aligned, unmasked store

    # assignments = softmax(classifier(hash_codes)); padded classifier
    # columns carry a -1e30 bias -> exp underflows to exactly 0, so the
    # normalization over the real classes is unchanged.  Exact divide here
    # (user-visible probabilities must sum to 1).
    logits = jnp.dot(hc.astype(bf16), w_cls_ref[...],
                     preferred_element_type=f32) + b_cls_ref[...]
    e = jnp.exp(logits - jnp.max(logits, axis=1, keepdims=True))
    out_ref[:, F + Lp:] = e / jnp.sum(e, axis=1, keepdims=True)


def prepare_lthnet_weights(params, prototypes):
    """One-time host-side weight prep (hoisted out of the forward path).

    * bf16 MXU operands, f32 biases (v5e VPU/EUP have no bf16).
    * fc_selector | fc_hallucinator fused into one [F, F+P] matmul.
    * hash_layer / classifier padded to 128 output lanes (zero weights; the
      classifier's pad bias is -1e30 so its softmax stays exact).
    """
    bf16, f32 = jnp.bfloat16, jnp.float32
    F = params["w_fc"].shape[1]
    L = params["w_hash"].shape[1]
    K = params["w_cls"].shape[1]
    P = params["w_hal"].shape[1]
    assert prototypes.shape == (P, F), "prototypes error"
    Lp = _round_up(L, 128)
    Kp = _round_up(K, 128)

    w_hash = jnp.zeros((F, Lp), f32).at[:, :L].set(params["w_hash"]).astype(bf16)
    b_hash = jnp.zeros((1, Lp), f32).at[:, :L].set(params["b_hash"])
    w_cls = jnp.zeros((Lp, Kp), f32).at[:L, :K].set(params["w_cls"]).astype(bf16)
    b_cls = jnp.full((1, Kp), -1e30, f32).at[:, :K].set(params["b_cls"])

    w_halsel = jnp.concatenate([params["w_sel"], params["w_hal"]],
                               axis=1).astype(bf16)
    b_halsel = jnp.concatenate([params["b_sel"], params["b_hal"]],
                               axis=1).astype(f32)

    return dict(
        dims=(F, L, K, P, Lp, Kp),
        proto=prototypes.astype(bf16),
        w_stem=params["w_stem"].astype(bf16),
        b_stem=params["b_stem"].astype(f32),
        w_fc=params["w_fc"].astype(bf16),
        b_fc=params["b_fc"].astype(f32),
        w_halsel=w_halsel, b_halsel=b_halsel,
        w_hash=w_hash, b_hash=b_hash,
        w_cls=w_cls, b_cls=b_cls,
    )


def lthnet_forward(x, prepped, dynamic_meta_embedding=True, block_b=None):
    """x: [B, C, H, W] float32. Returns (hash_codes, assignments, direct_feature)."""
    B, C, H, W = x.shape
    HW = H * W
    F, L, K, P, Lp, Kp = prepped["dims"]
    assert F % 128 == 0, "feature_dim must be a multiple of 128 (packed slab)"
    slab = F + Lp + Kp

    # Metadata-only reshape; x stays f32 in HBM (pool + cast happen in-kernel).
    x3 = x.reshape(B, C, HW)

    TB = block_b if block_b is not None else _pick_batch_tile(B)
    TB = max(8, _round_up(TB, 8))
    if B < TB:
        # Tiny batch: pad a handful of rows so a single block covers it.
        x3 = jnp.pad(x3, ((0, TB - B), (0, 0), (0, 0)))
        Bk = TB
    else:
        # No whole-array pad: a ragged last block is handled by Pallas
        # edge-block masking (those rows are discarded below anyway).
        Bk = B
    grid_b = pl.cdiv(Bk, TB)

    row3 = lambda i: (i, 0, 0)
    row2 = lambda i: (i, 0)
    const = lambda i: (0, 0)

    names = ["w_stem", "b_stem", "w_fc", "b_fc"]
    if dynamic_meta_embedding:
        names += ["w_halsel", "b_halsel"]
    names += ["w_hash", "b_hash", "w_cls", "b_cls"]

    in_arrays = [x3]
    if dynamic_meta_embedding:
        in_arrays.append(prepped["proto"])
    in_arrays += [prepped[n] for n in names]

    # VMEM budget: x/out tiles double-buffered, weights single-buffered,
    # 2x headroom for intermediates; capped at 64 MiB (v7x physical).
    x_tile_bytes = TB * C * HW * 4
    out_tile_bytes = TB * slab * 4
    w_bytes = sum(int(a.size) * a.dtype.itemsize for a in in_arrays[1:])
    est = 2 * (x_tile_bytes + out_tile_bytes) + w_bytes
    vmem_limit = int(min(64 * 2**20, max(32 * 2**20, 2 * est)))

    def make_call(single_buffer_weights):
        def wspec(a):
            # Constant block index across the whole grid -> one resident copy.
            if single_buffer_weights:
                return pl.BlockSpec(a.shape, const,
                                    pipeline_mode=pl.Buffered(1))
            return pl.BlockSpec(a.shape, const)

        in_specs = [pl.BlockSpec((TB, C, HW), row3)]
        in_specs += [wspec(a) for a in in_arrays[1:]]
        return pl.pallas_call(
            functools.partial(_lthnet_kernel, dynamic_meta_embedding),
            out_shape=jax.ShapeDtypeStruct((Bk, slab), jnp.float32),
            grid_spec=pltpu.PrefetchScalarGridSpec(
                num_scalar_prefetch=0,
                grid=(grid_b,),
                in_specs=in_specs,
                out_specs=pl.BlockSpec((TB, slab), row2),
            ),
            compiler_params=pltpu.CompilerParams(
                dimension_semantics=("parallel",),
                vmem_limit_bytes=vmem_limit),
        )

    try:
        out = make_call(True)(*in_arrays)
    except Exception:
        # Fallback for jax builds where pipeline_mode=pl.Buffered(1) is not
        # accepted on a top-level pallas_call BlockSpec; default (double)
        # buffering of the resident weights is functionally identical.
        out = make_call(False)(*in_arrays)

    direct_feature = out[:B, 0:F]
    hash_codes = out[:B, F:F + L]
    assignments = out[:B, F + Lp:F + Lp + K]
    return hash_codes, assignments, direct_feature


def lthnet_reference(x, prototypes, params, dynamic_meta_embedding=True):
    """Pure-JAX f32 reference matching the PyTorch forward (with the stand-in stem)."""
    B, C, H, W = x.shape
    pooled = jnp.mean(x.reshape(B, C, H * W), axis=-1)
    feat = jnp.maximum(pooled @ params["w_stem"] + params["b_stem"], 0.0)
    h = jnp.maximum(feat @ params["w_fc"] + params["b_fc"], 0.0)
    direct = h
    if dynamic_meta_embedding:
        att = jax.nn.softmax(h @ params["w_hal"] + params["b_hal"], axis=1)
        memory = att @ prototypes
        sel = jnp.tanh(h @ params["w_sel"] + params["b_sel"])
        x_meta = direct + sel * memory
    else:
        x_meta = direct
    hc = jnp.tanh(x_meta @ params["w_hash"] + params["b_hash"])
    assign = jax.nn.softmax(hc @ params["w_cls"] + params["b_cls"], axis=1)
    return hc, assign, direct


def init_params(key, c_in, feature_dim, code_length, num_classes, num_prototypes):
    """Deterministic PyTorch-style Linear init (uniform +-1/sqrt(fan_in))."""
    def linear(k, fan_in, fan_out):
        bound = 1.0 / float(fan_in) ** 0.5
        kw, kb = jax.random.split(k)
        w = jax.random.uniform(kw, (fan_in, fan_out), jnp.float32, -bound, bound)
        b = jax.random.uniform(kb, (1, fan_out), jnp.float32, -bound, bound)
        return w, b

    ks = jax.random.split(key, 6)
    w_stem, b_stem = linear(ks[0], c_in, 512)                  # backbone stand-in
    w_fc, b_fc = linear(ks[1], 512, feature_dim)               # self.fc
    w_hal, b_hal = linear(ks[2], feature_dim, num_prototypes)  # self.fc_hallucinator
    w_sel, b_sel = linear(ks[3], feature_dim, feature_dim)     # self.fc_selector
    w_hash, b_hash = linear(ks[4], feature_dim, code_length)   # self.hash_layer
    w_cls, b_cls = linear(ks[5], code_length, num_classes)     # self.classifier
    return dict(w_stem=w_stem, b_stem=b_stem, w_fc=w_fc, b_fc=b_fc,
                w_hal=w_hal, b_hal=b_hal, w_sel=w_sel, b_sel=b_sel,
                w_hash=w_hash, b_hash=b_hash, w_cls=w_cls, b_cls=b_cls)


if __name__ == "__main__":
    key = jax.random.PRNGKey(0)
    B, C, H, W = 2, 4, 16, 16
    feature_dim, code_length, num_classes, num_prototypes = 128, 64, 32, 32

    k_x, k_p, k_params = jax.random.split(key, 3)
    x = jax.random.normal(k_x, (B, C, H, W), jnp.float32)
    prototypes = jax.random.normal(k_p, (num_prototypes, feature_dim), jnp.float32)
    params = init_params(k_params, C, feature_dim, code_length, num_classes,
                         num_prototypes)

    # One-time weight prep, hoisted out of the forward path.
    prepped = prepare_lthnet_weights(params, prototypes)

    # dynamic_meta_embedding = True (full meta-embedding path)
    hc, asg, direct = lthnet_forward(x, prepped, True)
    # dynamic_meta_embedding = False
    hc_nf, asg_nf, direct_nf = lthnet_forward(x, prepped, False)
    jax.block_until_ready((hc, asg, direct, hc_nf, asg_nf, direct_nf))

    assert hc.shape == (B, code_length)
    assert asg.shape == (B, num_classes)
    assert direct.shape == (B, feature_dim)
    assert hc_nf.shape == (B, code_length)
    assert asg_nf.shape == (B, num_classes)
    assert direct_nf.shape == (B, feature_dim)

    # Pure-JAX f32 reference check (bf16 MXU operands -> loose tolerance).
    for dyn, got in ((True, (hc, asg, direct)),
                     (False, (hc_nf, asg_nf, direct_nf))):
        ref = lthnet_reference(x, prototypes, params, dyn)
        for g, r in zip(got, ref):
            err = float(jnp.max(jnp.abs(g.astype(jnp.float32) - r)))
            assert err < 5e-2, f"mismatch (dyn={dyn}): max abs err {err}"

    print("KERNEL_OK")
</pallas_src>

<mosaic_0001>
module attributes {stable_mosaic.version = 11 : i64} {
  func.func @_lthnet_kernel(%arg0: i32, %arg1: memref<8x4x256xf32, #tpu.memory_space<vmem>>, %arg2: memref<32x128xbf16, #tpu.memory_space<vmem>>, %arg3: memref<4x512xbf16, #tpu.memory_space<vmem>>, %arg4: memref<1x512xf32, #tpu.memory_space<vmem>>, %arg5: memref<512x128xbf16, #tpu.memory_space<vmem>>, %arg6: memref<1x128xf32, #tpu.memory_space<vmem>>, %arg7: memref<128x160xbf16, #tpu.memory_space<vmem>>, %arg8: memref<1x160xf32, #tpu.memory_space<vmem>>, %arg9: memref<128x128xbf16, #tpu.memory_space<vmem>>, %arg10: memref<1x128xf32, #tpu.memory_space<vmem>>, %arg11: memref<128x128xbf16, #tpu.memory_space<vmem>>, %arg12: memref<1x128xf32, #tpu.memory_space<vmem>>, %arg13: memref<8x384xf32, #tpu.memory_space<vmem>>) attributes {dimension_semantics = [#tpu.dimension_semantics<parallel>], iteration_bounds = array<i64: 1>, scalar_prefetch = 0 : i64, scratch_operands = 0 : i64, tpu.core_type = #tpu.core_type<tc>, window_params = [{transform_indices = @transform_0, window_bounds = array<i64: 8, 4, 256>}, {pipeline_mode = #tpu.pipeline_mode<synchronous>, transform_indices = @transform_1, window_bounds = array<i64: 32, 128>}, {pipeline_mode = #tpu.pipeline_mode<synchronous>, transform_indices = @transform_2, window_bounds = array<i64: 4, 512>}, {pipeline_mode = #tpu.pipeline_mode<synchronous>, transform_indices = @transform_3, window_bounds = array<i64: 1, 512>}, {pipeline_mode = #tpu.pipeline_mode<synchronous>, transform_indices = @transform_4, window_bounds = array<i64: 512, 128>}, {pipeline_mode = #tpu.pipeline_mode<synchronous>, transform_indices = @transform_5, window_bounds = array<i64: 1, 128>}, {pipeline_mode = #tpu.pipeline_mode<synchronous>, transform_indices = @transform_6, window_bounds = array<i64: 128, 160>}, {pipeline_mode = #tpu.pipeline_mode<synchronous>, transform_indices = @transform_7, window_bounds = array<i64: 1, 160>}, {pipeline_mode = #tpu.pipeline_mode<synchronous>, transform_indices = @transform_8, window_bounds = array<i64: 128, 128>}, {pipeline_mode = #tpu.pipeline_mode<synchronous>, transform_indices = @transform_9, window_bounds = array<i64: 1, 128>}, {pipeline_mode = #tpu.pipeline_mode<synchronous>, transform_indices = @transform_10, window_bounds = array<i64: 128, 128>}, {pipeline_mode = #tpu.pipeline_mode<synchronous>, transform_indices = @transform_11, window_bounds = array<i64: 1, 128>}, {transform_indices = @transform_12, window_bounds = array<i64: 8, 384>}]} {
    %c0 = arith.constant 0 : index
    %c0_0 = arith.constant 0 : index
    %c0_1 = arith.constant 0 : index
    %0 = vector.load %arg1[%c0, %c0_0, %c0_1] : memref<8x4x256xf32, #tpu.memory_space<vmem>>, vector<8x4x256xf32>
    %cst = arith.constant dense<0.000000e+00> : vector<8x4xf32>
    %1 = vector.multi_reduction <add>, %0, %cst [2] : vector<8x4x256xf32> to vector<8x4xf32>
    %cst_2 = arith.constant 2.560000e+02 : f32
    %2 = vector.broadcast %cst_2 : f32 to vector<8x4xf32>
    %3 = arith.divf %1, %2 : vector<8x4xf32>
    %4 = arith.truncf %3 : vector<8x4xf32> to vector<8x4xbf16>
    %c0_3 = arith.constant 0 : index
    %c0_4 = arith.constant 0 : index
    %5 = vector.load %arg3[%c0_3, %c0_4] : memref<4x512xbf16, #tpu.memory_space<vmem>>, vector<4x512xbf16>
    %cst_5 = arith.constant dense<0.000000e+00> : vector<8x512xf32>
    %6 = tpu.matmul %4, %5, %cst_5 {dimension_numbers = #tpu.dot_dimension_numbers<[1], [0], [0], [1], [0, 0, 1, 1], [], []>} : vector<8x4xbf16>, vector<4x512xbf16>, vector<8x512xf32> -> vector<8x512xf32>
    %c0_6 = arith.constant 0 : index
    %c0_7 = arith.constant 0 : index
    %7 = vector.load %arg4[%c0_6, %c0_7] : memref<1x512xf32, #tpu.memory_space<vmem>>, vector<1x512xf32>
    %8 = vector.broadcast %7 : vector<1x512xf32> to vector<8x512xf32>
    %9 = arith.addf %6, %8 : vector<8x512xf32>
    %cst_8 = arith.constant 0.000000e+00 : f32
    %10 = vector.broadcast %cst_8 : f32 to vector<8x512xf32>
    %11 = arith.maximumf %9, %10 : vector<8x512xf32>
    %12 = arith.truncf %11 : vector<8x512xf32> to vector<8x512xbf16>
    %c0_9 = arith.constant 0 : index
    %c0_10 = arith.constant 0 : index
    %13 = vector.load %arg5[%c0_9, %c0_10] : memref<512x128xbf16, #tpu.memory_space<vmem>>, vector<512x128xbf16>
    %cst_11 = arith.constant dense<0.000000e+00> : vector<8x128xf32>
    %14 = tpu.matmul %12, %13, %cst_11 {dimension_numbers = #tpu.dot_dimension_numbers<[1], [0], [0], [1], [0, 0, 1, 1], [], []>} : vector<8x512xbf16>, vector<512x128xbf16>, vector<8x128xf32> -> vector<8x128xf32>
    %c0_12 = arith.constant 0 : index
    %c0_13 = arith.constant 0 : index
    %15 = vector.load %arg6[%c0_12, %c0_13] : memref<1x128xf32, #tpu.memory_space<vmem>>, vector<1x128xf32>
    %16 = vector.broadcast %15 : vector<1x128xf32> to vector<8x128xf32>
    %17 = arith.addf %14, %16 : vector<8x128xf32>
    %cst_14 = arith.constant 0.000000e+00 : f32
    %18 = vector.broadcast %cst_14 : f32 to vector<8x128xf32>
    %19 = arith.maximumf %17, %18 : vector<8x128xf32>
    %c0_15 = arith.constant 0 : index
    %c0_16 = arith.constant 0 : index
    %20 = vector.load %arg13[%c0_15, %c0_16] : memref<8x384xf32, #tpu.memory_space<vmem>>, vector<8x128xf32>
    tpu.vector_store %arg13[%c0_15, %c0_16], %19 {strides = array<i32>} : memref<8x384xf32, #tpu.memory_space<vmem>>, vector<8x128xf32>,
    %21 = arith.truncf %19 : vector<8x128xf32> to vector<8x128xbf16>
    %c0_17 = arith.constant 0 : index
    %c0_18 = arith.constant 0 : index
    %22 = vector.load %arg7[%c0_17, %c0_18] : memref<128x160xbf16, #tpu.memory_space<vmem>>, vector<128x160xbf16>
    %cst_19 = arith.constant dense<0.000000e+00> : vector<8x160xf32>
    %23 = tpu.matmul %21, %22, %cst_19 {dimension_numbers = #tpu.dot_dimension_numbers<[1], [0], [0], [1], [0, 0, 1, 1], [], []>} : vector<8x128xbf16>, vector<128x160xbf16>, vector<8x160xf32> -> vector<8x160xf32>
    %c0_20 = arith.constant 0 : index
    %c0_21 = arith.constant 0 : index
    %24 = vector.load %arg8[%c0_20, %c0_21] : memref<1x160xf32, #tpu.memory_space<vmem>>, vector<1x160xf32>
    %25 = vector.broadcast %24 : vector<1x160xf32> to vector<8x160xf32>
    %26 = arith.addf %23, %25 : vector<8x160xf32>
    %27 = vector.extract_strided_slice %26 {offsets = [0, 0], sizes = [8, 128], strides = [1, 1]} : vector<8x160xf32> to vector<8x128xf32>
    %28 = math.tanh %27 : vector<8x128xf32>
    %29 = vector.extract_strided_slice %26 {offsets = [0, 128], sizes = [8, 32], strides = [1, 1]} : vector<8x160xf32> to vector<8x32xf32>
    %cst_22 = arith.constant dense<0xFF800000> : vector<8xf32>
    %30 = vector.multi_reduction <maximumf>, %29, %cst_22 [1] : vector<8x32xf32> to vector<8xf32>
    %31 = vector.shape_cast %30 : vector<8xf32> to vector<8x1xf32>
    %32 = vector.broadcast %31 : vector<8x1xf32> to vector<8x32xf32>
    %33 = arith.subf %29, %32 : vector<8x32xf32>
    %34 = math.exp %33 : vector<8x32xf32>
    %cst_23 = arith.constant dense<0.000000e+00> : vector<8xf32>
    %35 = vector.multi_reduction <add>, %34, %cst_23 [1] : vector<8x32xf32> to vector<8xf32>
    %36 = vector.shape_cast %35 : vector<8xf32> to vector<8x1xf32>
    %37 = tpu.reciprocal %36 {approx = true} : vector<8x1xf32> -> vector<8x1xf32>
    %38 = vector.broadcast %37 : vector<8x1xf32> to vector<8x32xf32>
    %39 = arith.mulf %34, %38 : vector<8x32xf32>
    %40 = arith.truncf %39 : vector<8x32xf32> to vector<8x32xbf16>
    %c0_24 = arith.constant 0 : index
    %c0_25 = arith.constant 0 : index
    %41 = vector.load %arg2[%c0_24, %c0_25] : memref<32x128xbf16, #tpu.memory_space<vmem>>, vector<32x128xbf16>
    %cst_26 = arith.constant dense<0.000000e+00> : vector<8x128xf32>
    %42 = tpu.matmul %40, %41, %cst_26 {dimension_numbers = #tpu.dot_dimension_numbers<[1], [0], [0], [1], [0, 0, 1, 1], [], []>} : vector<8x32xbf16>, vector<32x128xbf16>, vector<8x128xf32> -> vector<8x128xf32>
    %43 = arith.mulf %28, %42 : vector<8x128xf32>
    %44 = arith.addf %19, %43 : vector<8x128xf32>
    %45 = arith.truncf %44 : vector<8x128xf32> to vector<8x128xbf16>
    %c0_27 = arith.constant 0 : index
    %c0_28 = arith.constant 0 : index
    %46 = vector.load %arg9[%c0_27, %c0_28] : memref<128x128xbf16, #tpu.memory_space<vmem>>, vector<128x128xbf16>
    %cst_29 = arith.constant dense<0.000000e+00> : vector<8x128xf32>
    %47 = tpu.matmul %45, %46, %cst_29 {dimension_numbers = #tpu.dot_dimension_numbers<[1], [0], [0], [1], [0, 0, 1, 1], [], []>} : vector<8x128xbf16>, vector<128x128xbf16>, vector<8x128xf32> -> vector<8x128xf32>
    %c0_30 = arith.constant 0 : index
    %c0_31 = arith.constant 0 : index
    %48 = vector.load %arg10[%c0_30, %c0_31] : memref<1x128xf32, #tpu.memory_space<vmem>>, vector<1x128xf32>
    %49 = vector.broadcast %48 : vector<1x128xf32> to vector<8x128xf32>
    %50 = arith.addf %47, %49 : vector<8x128xf32>
    %51 = math.tanh %50 : vector<8x128xf32>
    %c0_32 = arith.constant 0 : index
    %c128 = arith.constant 128 : index
    %52 = vector.load %arg13[%c0_32, %c128] : memref<8x384xf32, #tpu.memory_space<vmem>>, vector<8x128xf32>
    tpu.vector_store %arg13[%c0_32, %c128], %51 {strides = array<i32>} : memref<8x384xf32, #tpu.memory_space<vmem>>, vector<8x128xf32>,
    %53 = arith.truncf %51 : vector<8x128xf32> to vector<8x128xbf16>
    %c0_33 = arith.constant 0 : index
    %c0_34 = arith.constant 0 : index
    %54 = vector.load %arg11[%c0_33, %c0_34] : memref<128x128xbf16, #tpu.memory_space<vmem>>, vector<128x128xbf16>
    %cst_35 = arith.constant dense<0.000000e+00> : vector<8x128xf32>
    %55 = tpu.matmul %53, %54, %cst_35 {dimension_numbers = #tpu.dot_dimension_numbers<[1], [0], [0], [1], [0, 0, 1, 1], [], []>} : vector<8x128xbf16>, vector<128x128xbf16>, vector<8x128xf32> -> vector<8x128xf32>
    %c0_36 = arith.constant 0 : index
    %c0_37 = arith.constant 0 : index
    %56 = vector.load %arg12[%c0_36, %c0_37] : memref<1x128xf32, #tpu.memory_space<vmem>>, vector<1x128xf32>
    %57 = vector.broadcast %56 : vector<1x128xf32> to vector<8x128xf32>
    %58 = arith.addf %55, %57 : vector<8x128xf32>
    %cst_38 = arith.constant dense<0xFF800000> : vector<8xf32>
    %59 = vector.multi_reduction <maximumf>, %58, %cst_38 [1] : vector<8x128xf32> to vector<8xf32>
    %60 = vector.shape_cast %59 : vector<8xf32> to vector<8x1xf32>
    %61 = vector.broadcast %60 : vector<8x1xf32> to vector<8x128xf32>
    %62 = arith.subf %58, %61 : vector<8x128xf32>
    %63 = math.exp %62 : vector<8x128xf32>
    %cst_39 = arith.constant dense<0.000000e+00> : vector<8xf32>
    %64 = vector.multi_reduction <add>, %63, %cst_39 [1] : vector<8x128xf32> to vector<8xf32>
    %65 = vector.shape_cast %64 : vector<8xf32> to vector<8x1xf32>
    %66 = vector.broadcast %65 : vector<8x1xf32> to vector<8x128xf32>
    %67 = arith.divf %63, %66 : vector<8x128xf32>
    %c0_40 = arith.constant 0 : index
    %c256 = arith.constant 256 : index
    %68 = vector.load %arg13[%c0_40, %c256] : memref<8x384xf32, #tpu.memory_space<vmem>>, vector<8x128xf32>
    tpu.vector_store %arg13[%c0_40, %c256], %67 {strides = array<i32>} : memref<8x384xf32, #tpu.memory_space<vmem>>, vector<8x128xf32>,
    return
  }
  func.func @transform_0(%arg0: i32) -> (i32, i32, i32) {
    %c0_i32 = arith.constant 0 : i32
    %c0_i32_0 = arith.constant 0 : i32
    %c0_i32_1 = arith.constant 0 : i32
    return %arg0, %c0_i32, %c0_i32_0 : i32, i32, i32
  }
  func.func @transform_1(%arg0: i32) -> (i32, i32) {
    %c0_i32 = arith.constant 0 : i32
    %c0_i32_0 = arith.constant 0 : i32
    %c0_i32_1 = arith.constant 0 : i32
    return %c0_i32, %c0_i32_0 : i32, i32
  }
  func.func @transform_2(%arg0: i32) -> (i32, i32) {
    %c0_i32 = arith.constant 0 : i32
    %c0_i32_0 = arith.constant 0 : i32
    %c0_i32_1 = arith.constant 0 : i32
    return %c0_i32, %c0_i32_0 : i32, i32
  }
  func.func @transform_3(%arg0: i32) -> (i32, i32) {
    %c0_i32 = arith.constant 0 : i32
    %c0_i32_0 = arith.constant 0 : i32
    %c0_i32_1 = arith.constant 0 : i32
    return %c0_i32, %c0_i32_0 : i32, i32
  }
  func.func @transform_4(%arg0: i32) -> (i32, i32) {
    %c0_i32 = arith.constant 0 : i32
    %c0_i32_0 = arith.constant 0 : i32
    %c0_i32_1 = arith.constant 0 : i32
    return %c0_i32, %c0_i32_0 : i32, i32
  }
  func.func @transform_5(%arg0: i32) -> (i32, i32) {
    %c0_i32 = arith.constant 0 : i32
    %c0_i32_0 = arith.constant 0 : i32
    %c0_i32_1 = arith.constant 0 : i32
    return %c0_i32, %c0_i32_0 : i32, i32
  }
  func.func @transform_6(%arg0: i32) -> (i32, i32) {
    %c0_i32 = arith.constant 0 : i32
    %c0_i32_0 = arith.constant 0 : i32
    %c0_i32_1 = arith.constant 0 : i32
    return %c0_i32, %c0_i32_0 : i32, i32
  }
  func.func @transform_7(%arg0: i32) -> (i32, i32) {
    %c0_i32 = arith.constant 0 : i32
    %c0_i32_0 = arith.constant 0 : i32
    %c0_i32_1 = arith.constant 0 : i32
    return %c0_i32, %c0_i32_0 : i32, i32
  }
  func.func @transform_8(%arg0: i32) -> (i32, i32) {
    %c0_i32 = arith.constant 0 : i32
    %c0_i32_0 = arith.constant 0 : i32
    %c0_i32_1 = arith.constant 0 : i32
    return %c0_i32, %c0_i32_0 : i32, i32
  }
  func.func @transform_9(%arg0: i32) -> (i32, i32) {
    %c0_i32 = arith.constant 0 : i32
    %c0_i32_0 = arith.constant 0 : i32
    %c0_i32_1 = arith.constant 0 : i32
    return %c0_i32, %c0_i32_0 : i32, i32
  }
  func.func @transform_10(%arg0: i32) -> (i32, i32) {
    %c0_i32 = arith.constant 0 : i32
    %c0_i32_0 = arith.constant 0 : i32
    %c0_i32_1 = arith.constant 0 : i32
    return %c0_i32, %c0_i32_0 : i32, i32
  }
  func.func @transform_11(%arg0: i32) -> (i32, i32) {
    %c0_i32 = arith.constant 0 : i32
    %c0_i32_0 = arith.constant 0 : i32
    %c0_i32_1 = arith.constant 0 : i32
    return %c0_i32, %c0_i32_0 : i32, i32
  }
  func.func @transform_12(%arg0: i32) -> (i32, i32) {
    %c0_i32 = arith.constant 0 : i32
    %c0_i32_0 = arith.constant 0 : i32
    return %arg0, %c0_i32 : i32, i32
  }
}

module attributes {stable_mosaic.version = 11 : i64} {
  func.func @_lthnet_kernel(%arg0: i32, %arg1: memref<8x4x256xf32, #tpu.memory_space<vmem>>, %arg2: memref<32x128xbf16, #tpu.memory_space<vmem>>, %arg3: memref<4x512xbf16, #tpu.memory_space<vmem>>, %arg4: memref<1x512xf32, #tpu.memory_space<vmem>>, %arg5: memref<512x128xbf16, #tpu.memory_space<vmem>>, %arg6: memref<1x128xf32, #tpu.memory_space<vmem>>, %arg7: memref<128x160xbf16, #tpu.memory_space<vmem>>, %arg8: memref<1x160xf32, #tpu.memory_space<vmem>>, %arg9: memref<128x128xbf16, #tpu.memory_space<vmem>>, %arg10: memref<1x128xf32, #tpu.memory_space<vmem>>, %arg11: memref<128x128xbf16, #tpu.memory_space<vmem>>, %arg12: memref<1x128xf32, #tpu.memory_space<vmem>>, %arg13: memref<8x384xf32, #tpu.memory_space<vmem>>) attributes {dimension_semantics = [#tpu.dimension_semantics<parallel>], iteration_bounds = array<i64: 1>, scalar_prefetch = 0 : i64, scratch_operands = 0 : i64, tpu.core_type = #tpu.core_type<tc>, window_params = [{transform_indices = @transform_0, window_bounds = array<i64: 8, 4, 256>}, {pipeline_mode = #tpu.pipeline_mode<synchronous>, transform_indices = @transform_1, window_bounds = array<i64: 32, 128>}, {pipeline_mode = #tpu.pipeline_mode<synchronous>, transform_indices = @transform_2, window_bounds = array<i64: 4, 512>}, {pipeline_mode = #tpu.pipeline_mode<synchronous>, transform_indices = @transform_3, window_bounds = array<i64: 1, 512>}, {pipeline_mode = #tpu.pipeline_mode<synchronous>, transform_indices = @transform_4, window_bounds = array<i64: 512, 128>}, {pipeline_mode = #tpu.pipeline_mode<synchronous>, transform_indices = @transform_5, window_bounds = array<i64: 1, 128>}, {pipeline_mode = #tpu.pipeline_mode<synchronous>, transform_indices = @transform_6, window_bounds = array<i64: 128, 160>}, {pipeline_mode = #tpu.pipeline_mode<synchronous>, transform_indices = @transform_7, window_bounds = array<i64: 1, 160>}, {pipeline_mode = #tpu.pipeline_mode<synchronous>, transform_indices = @transform_8, window_bounds = array<i64: 128, 128>}, {pipeline_mode = #tpu.pipeline_mode<synchronous>, transform_indices = @transform_9, window_bounds = array<i64: 1, 128>}, {pipeline_mode = #tpu.pipeline_mode<synchronous>, transform_indices = @transform_10, window_bounds = array<i64: 128, 128>}, {pipeline_mode = #tpu.pipeline_mode<synchronous>, transform_indices = @transform_11, window_bounds = array<i64: 1, 128>}, {transform_indices = @transform_12, window_bounds = array<i64: 8, 384>}]} {
    %c0 = arith.constant 0 : index
    %c0_0 = arith.constant 0 : index
    %c0_1 = arith.constant 0 : index
    %0 = vector.load %arg1[%c0, %c0_0, %c0_1] : memref<8x4x256xf32, #tpu.memory_space<vmem>>, vector<8x4x256xf32>
    %cst = arith.constant dense<0.000000e+00> : vector<8x4xf32>
    %1 = vector.multi_reduction <add>, %0, %cst [2] : vector<8x4x256xf32> to vector<8x4xf32>
    %cst_2 = arith.constant 2.560000e+02 : f32
    %2 = vector.broadcast %cst_2 : f32 to vector<8x4xf32>
    %3 = arith.divf %1, %2 : vector<8x4xf32>
    %4 = arith.truncf %3 : vector<8x4xf32> to vector<8x4xbf16>
    %c0_3 = arith.constant 0 : index
    %c0_4 = arith.constant 0 : index
    %5 = vector.load %arg3[%c0_3, %c0_4] : memref<4x512xbf16, #tpu.memory_space<vmem>>, vector<4x512xbf16>
    %cst_5 = arith.constant dense<0.000000e+00> : vector<8x512xf32>
    %6 = tpu.matmul %4, %5, %cst_5 {dimension_numbers = #tpu.dot_dimension_numbers<[1], [0], [0], [1], [0, 0, 1, 1], [], []>} : vector<8x4xbf16>, vector<4x512xbf16>, vector<8x512xf32> -> vector<8x512xf32>
    %c0_6 = arith.constant 0 : index
    %c0_7 = arith.constant 0 : index
    %7 = vector.load %arg4[%c0_6, %c0_7] : memref<1x512xf32, #tpu.memory_space<vmem>>, vector<1x512xf32>
    %8 = vector.broadcast %7 : vector<1x512xf32> to vector<8x512xf32>
    %9 = arith.addf %6, %8 : vector<8x512xf32>
    %cst_8 = arith.constant 0.000000e+00 : f32
    %10 = vector.broadcast %cst_8 : f32 to vector<8x512xf32>
    %11 = arith.maximumf %9, %10 : vector<8x512xf32>
    %12 = arith.truncf %11 : vector<8x512xf32> to vector<8x512xbf16>
    %c0_9 = arith.constant 0 : index
    %c0_10 = arith.constant 0 : index
    %13 = vector.load %arg5[%c0_9, %c0_10] : memref<512x128xbf16, #tpu.memory_space<vmem>>, vector<512x128xbf16>
    %cst_11 = arith.constant dense<0.000000e+00> : vector<8x128xf32>
    %14 = tpu.matmul %12, %13, %cst_11 {dimension_numbers = #tpu.dot_dimension_numbers<[1], [0], [0], [1], [0, 0, 1, 1], [], []>} : vector<8x512xbf16>, vector<512x128xbf16>, vector<8x128xf32> -> vector<8x128xf32>
    %c0_12 = arith.constant 0 : index
    %c0_13 = arith.constant 0 : index
    %15 = vector.load %arg6[%c0_12, %c0_13] : memref<1x128xf32, #tpu.memory_space<vmem>>, vector<1x128xf32>
    %16 = vector.broadcast %15 : vector<1x128xf32> to vector<8x128xf32>
    %17 = arith.addf %14, %16 : vector<8x128xf32>
    %cst_14 = arith.constant 0.000000e+00 : f32
    %18 = vector.broadcast %cst_14 : f32 to vector<8x128xf32>
    %19 = arith.maximumf %17, %18 : vector<8x128xf32>
    %c0_15 = arith.constant 0 : index
    %c0_16 = arith.constant 0 : index
    %20 = vector.load %arg13[%c0_15, %c0_16] : memref<8x384xf32, #tpu.memory_space<vmem>>, vector<8x128xf32>
    tpu.vector_store %arg13[%c0_15, %c0_16], %19 {strides = array<i32>} : memref<8x384xf32, #tpu.memory_space<vmem>>, vector<8x128xf32>,
    %21 = arith.truncf %19 : vector<8x128xf32> to vector<8x128xbf16>
    %c0_17 = arith.constant 0 : index
    %c0_18 = arith.constant 0 : index
    %22 = vector.load %arg7[%c0_17, %c0_18] : memref<128x160xbf16, #tpu.memory_space<vmem>>, vector<128x160xbf16>
    %cst_19 = arith.constant dense<0.000000e+00> : vector<8x160xf32>
    %23 = tpu.matmul %21, %22, %cst_19 {dimension_numbers = #tpu.dot_dimension_numbers<[1], [0], [0], [1], [0, 0, 1, 1], [], []>} : vector<8x128xbf16>, vector<128x160xbf16>, vector<8x160xf32> -> vector<8x160xf32>
    %c0_20 = arith.constant 0 : index
    %c0_21 = arith.constant 0 : index
    %24 = vector.load %arg8[%c0_20, %c0_21] : memref<1x160xf32, #tpu.memory_space<vmem>>, vector<1x160xf32>
    %25 = vector.broadcast %24 : vector<1x160xf32> to vector<8x160xf32>
    %26 = arith.addf %23, %25 : vector<8x160xf32>
    %27 = vector.extract_strided_slice %26 {offsets = [0, 0], sizes = [8, 128], strides = [1, 1]} : vector<8x160xf32> to vector<8x128xf32>
    %28 = math.tanh %27 : vector<8x128xf32>
    %29 = vector.extract_strided_slice %26 {offsets = [0, 128], sizes = [8, 32], strides = [1, 1]} : vector<8x160xf32> to vector<8x32xf32>
    %cst_22 = arith.constant dense<0xFF800000> : vector<8xf32>
    %30 = vector.multi_reduction <maximumf>, %29, %cst_22 [1] : vector<8x32xf32> to vector<8xf32>
    %31 = vector.shape_cast %30 : vector<8xf32> to vector<8x1xf32>
    %32 = vector.broadcast %31 : vector<8x1xf32> to vector<8x32xf32>
    %33 = arith.subf %29, %32 : vector<8x32xf32>
    %34 = math.exp %33 : vector<8x32xf32>
    %cst_23 = arith.constant dense<0.000000e+00> : vector<8xf32>
    %35 = vector.multi_reduction <add>, %34, %cst_23 [1] : vector<8x32xf32> to vector<8xf32>
    %36 = vector.shape_cast %35 : vector<8xf32> to vector<8x1xf32>
    %37 = tpu.reciprocal %36 {approx = true} : vector<8x1xf32> -> vector<8x1xf32>
    %38 = vector.broadcast %37 : vector<8x1xf32> to vector<8x32xf32>
    %39 = arith.mulf %34, %38 : vector<8x32xf32>
    %40 = arith.truncf %39 : vector<8x32xf32> to vector<8x32xbf16>
    %c0_24 = arith.constant 0 : index
    %c0_25 = arith.constant 0 : index
    %41 = vector.load %arg2[%c0_24, %c0_25] : memref<32x128xbf16, #tpu.memory_space<vmem>>, vector<32x128xbf16>
    %cst_26 = arith.constant dense<0.000000e+00> : vector<8x128xf32>
    %42 = tpu.matmul %40, %41, %cst_26 {dimension_numbers = #tpu.dot_dimension_numbers<[1], [0], [0], [1], [0, 0, 1, 1], [], []>} : vector<8x32xbf16>, vector<32x128xbf16>, vector<8x128xf32> -> vector<8x128xf32>
    %43 = arith.mulf %28, %42 : vector<8x128xf32>
    %44 = arith.addf %19, %43 : vector<8x128xf32>
    %45 = arith.truncf %44 : vector<8x128xf32> to vector<8x128xbf16>
    %c0_27 = arith.constant 0 : index
    %c0_28 = arith.constant 0 : index
    %46 = vector.load %arg9[%c0_27, %c0_28] : memref<128x128xbf16, #tpu.memory_space<vmem>>, vector<128x128xbf16>
    %cst_29 = arith.constant dense<0.000000e+00> : vector<8x128xf32>
    %47 = tpu.matmul %45, %46, %cst_29 {dimension_numbers = #tpu.dot_dimension_numbers<[1], [0], [0], [1], [0, 0, 1, 1], [], []>} : vector<8x128xbf16>, vector<128x128xbf16>, vector<8x128xf32> -> vector<8x128xf32>
    %c0_30 = arith.constant 0 : index
    %c0_31 = arith.constant 0 : index
    %48 = vector.load %arg10[%c0_30, %c0_31] : memref<1x128xf32, #tpu.memory_space<vmem>>, vector<1x128xf32>
    %49 = vector.broadcast %48 : vector<1x128xf32> to vector<8x128xf32>
    %50 = arith.addf %47, %49 : vector<8x128xf32>
    %51 = math.tanh %50 : vector<8x128xf32>
    %c0_32 = arith.constant 0 : index
    %c128 = arith.constant 128 : index
    %52 = vector.load %arg13[%c0_32, %c128] : memref<8x384xf32, #tpu.memory_space<vmem>>, vector<8x128xf32>
    tpu.vector_store %arg13[%c0_32, %c128], %51 {strides = array<i32>} : memref<8x384xf32, #tpu.memory_space<vmem>>, vector<8x128xf32>,
    %53 = arith.truncf %51 : vector<8x128xf32> to vector<8x128xbf16>
    %c0_33 = arith.constant 0 : index
    %c0_34 = arith.constant 0 : index
    %54 = vector.load %arg11[%c0_33, %c0_34] : memref<128x128xbf16, #tpu.memory_space<vmem>>, vector<128x128xbf16>
    %cst_35 = arith.constant dense<0.000000e+00> : vector<8x128xf32>
    %55 = tpu.matmul %53, %54, %cst_35 {dimension_numbers = #tpu.dot_dimension_numbers<[1], [0], [0], [1], [0, 0, 1, 1], [], []>} : vector<8x128xbf16>, vector<128x128xbf16>, vector<8x128xf32> -> vector<8x128xf32>
    %c0_36 = arith.constant 0 : index
    %c0_37 = arith.constant 0 : index
    %56 = vector.load %arg12[%c0_36, %c0_37] : memref<1x128xf32, #tpu.memory_space<vmem>>, vector<1x128xf32>
    %57 = vector.broadcast %56 : vector<1x128xf32> to vector<8x128xf32>
    %58 = arith.addf %55, %57 : vector<8x128xf32>
    %cst_38 = arith.constant dense<0xFF800000> : vector<8xf32>
    %59 = vector.multi_reduction <maximumf>, %58, %cst_38 [1] : vector<8x128xf32> to vector<8xf32>
    %60 = vector.shape_cast %59 : vector<8xf32> to vector<8x1xf32>
    %61 = vector.broadcast %60 : vector<8x1xf32> to vector<8x128xf32>
    %62 = arith.subf %58, %61 : vector<8x128xf32>
    %63 = math.exp %62 : vector<8x128xf32>
    %cst_39 = arith.constant dense<0.000000e+00> : vector<8xf32>
    %64 = vector.multi_reduction <add>, %63, %cst_39 [1] : vector<8x128xf32> to vector<8xf32>
    %65 = vector.shape_cast %64 : vector<8xf32> to vector<8x1xf32>
    %66 = vector.broadcast %65 : vector<8x1xf32> to vector<8x128xf32>
    %67 = arith.divf %63, %66 : vector<8x128xf32>
    %c0_40 = arith.constant 0 : index
    %c256 = arith.constant 256 : index
    %68 = vector.load %arg13[%c0_40, %c256] : memref<8x384xf32, #tpu.memory_space<vmem>>, vector<8x128xf32>
    tpu.vector_store %arg13[%c0_40, %c256], %67 {strides = array<i32>} : memref<8x384xf32, #tpu.memory_space<vmem>>, vector<8x128xf32>,
    return
  }
  func.func @transform_0(%arg0: i32) -> (i32, i32, i32) {
    %c0_i32 = arith.constant 0 : i32
    %c0_i32_0 = arith.constant 0 : i32
    %c0_i32_1 = arith.constant 0 : i32
    return %arg0, %c0_i32, %c0_i32_0 : i32, i32, i32
  }
  func.func @transform_1(%arg0: i32) -> (i32, i32) {
    %c0_i32 = arith.constant 0 : i32
    %c0_i32_0 = arith.constant 0 : i32
    %c0_i32_1 = arith.constant 0 : i32
    return %c0_i32, %c0_i32_0 : i32, i32
  }
  func.func @transform_2(%arg0: i32) -> (i32, i32) {
    %c0_i32 = arith.constant 0 : i32
    %c0_i32_0 = arith.constant 0 : i32
    %c0_i32_1 = arith.constant 0 : i32
    return %c0_i32, %c0_i32_0 : i32, i32
  }
  func.func @transform_3(%arg0: i32) -> (i32, i32) {
    %c0_i32 = arith.constant 0 : i32
    %c0_i32_0 = arith.constant 0 : i32
    %c0_i32_1 = arith.constant 0 : i32
    return %c0_i32, %c0_i32_0 : i32, i32
  }
  func.func @transform_4(%arg0: i32) -> (i32, i32) {
    %c0_i32 = arith.constant 0 : i32
    %c0_i32_0 = arith.constant 0 : i32
    %c0_i32_1 = arith.constant 0 : i32
    return %c0_i32, %c0_i32_0 : i32, i32
  }
  func.func @transform_5(%arg0: i32) -> (i32, i32) {
    %c0_i32 = arith.constant 0 : i32
    %c0_i32_0 = arith.constant 0 : i32
    %c0_i32_1 = arith.constant 0 : i32
    return %c0_i32, %c0_i32_0 : i32, i32
  }
  func.func @transform_6(%arg0: i32) -> (i32, i32) {
    %c0_i32 = arith.constant 0 : i32
    %c0_i32_0 = arith.constant 0 : i32
    %c0_i32_1 = arith.constant 0 : i32
    return %c0_i32, %c0_i32_0 : i32, i32
  }
  func.func @transform_7(%arg0: i32) -> (i32, i32) {
    %c0_i32 = arith.constant 0 : i32
    %c0_i32_0 = arith.constant 0 : i32
    %c0_i32_1 = arith.constant 0 : i32
    return %c0_i32, %c0_i32_0 : i32, i32
  }
  func.func @transform_8(%arg0: i32) -> (i32, i32) {
    %c0_i32 = arith.constant 0 : i32
    %c0_i32_0 = arith.constant 0 : i32
    %c0_i32_1 = arith.constant 0 : i32
    return %c0_i32, %c0_i32_0 : i32, i32
  }
  func.func @transform_9(%arg0: i32) -> (i32, i32) {
    %c0_i32 = arith.constant 0 : i32
    %c0_i32_0 = arith.constant 0 : i32
    %c0_i32_1 = arith.constant 0 : i32
    return %c0_i32, %c0_i32_0 : i32, i32
  }
  func.func @transform_10(%arg0: i32) -> (i32, i32) {
    %c0_i32 = arith.constant 0 : i32
    %c0_i32_0 = arith.constant 0 : i32
    %c0_i32_1 = arith.constant 0 : i32
    return %c0_i32, %c0_i32_0 : i32, i32
  }
  func.func @transform_11(%arg0: i32) -> (i32, i32) {
    %c0_i32 = arith.constant 0 : i32
    %c0_i32_0 = arith.constant 0 : i32
    %c0_i32_1 = arith.constant 0 : i32
    return %c0_i32, %c0_i32_0 : i32, i32
  }
  func.func @transform_12(%arg0: i32) -> (i32, i32) {
    %c0_i32 = arith.constant 0 : i32
    %c0_i32_0 = arith.constant 0 : i32
    return %arg0, %c0_i32 : i32, i32
  }
}

</mosaic_0001>

<llo_original>
// kernel: tpu_custom_call.1
$region0: #{tpu_custom_call.1}
  #allocation0 [shape = 'u32[]', space=smem, size = 0x4, offset = 0x4, fixed_abs, tag = 'smem constant byte address 0x4 - core index']
  #allocation1 [shape = 'u32[72,128]{1,0:T(1,128)}', space=vmem, size = 0x9000, scoped, tag = 'internal scratch']
  %s0 = inlined_call_operand.vmem [shape: f32[8,4,256], index: 0, kind: input, shape index: {}]
  %s1 = inlined_call_operand.vmem [shape: bf16[32,128], index: 1, kind: input, shape index: {}]
  %s2 = inlined_call_operand.hbm [shape: bf16[4,512], index: 2, kind: input, shape index: {}]
  %s3 = inlined_call_operand.hbm [shape: f32[1,512], index: 3, kind: input, shape index: {}]
  %s4 = inlined_call_operand.hbm [shape: bf16[512,128], index: 4, kind: input, shape index: {}]
  %s5 = inlined_call_operand.hbm [shape: f32[1,128], index: 5, kind: input, shape index: {}]
  %s6 = inlined_call_operand.vmem [shape: bf16[128,160], index: 6, kind: input, shape index: {}]
  %s7 = inlined_call_operand.vmem [shape: f32[1,160], index: 7, kind: input, shape index: {}]
  %s8 = inlined_call_operand.vmem [shape: bf16[128,128], index: 8, kind: input, shape index: {}]
  %s9 = inlined_call_operand.vmem [shape: f32[1,128], index: 9, kind: input, shape index: {}]
  %s10 = inlined_call_operand.vmem [shape: bf16[128,128], index: 10, kind: input, shape index: {}]
  %s11 = inlined_call_operand.vmem [shape: f32[1,128], index: 11, kind: input, shape index: {}]
  %s12 = inlined_call_operand.hbm [shape: f32[8,384], index: 12, kind: output, shape index: {}]
  %s13 = sld [smem:[#allocation0]]
  $region74: #{tpu_custom_call.1} parent=0
    _
  %s15 = ssub.s32 1, %s13
  %s16 = scalar_select 0, %s15, %s13
  $region1: #{tpu_custom_call.1} parent=0
    #allocation2 [shape = 'u8[4096]{0}', space=vmem, size = 0x1000, scoped, tag = 'input window, operand 2, single buffered']
    #allocation3 [shape = 's32[1]{0}', space=sflag, size = 0x4, scoped, tag = 'scoped memory for tpu_custom_call.1']
    #allocation4 [shape = 's32[1]{0}', space=sflag, size = 0x4, scoped, tag = 'scoped memory for tpu_custom_call.1']
    #allocation5 [shape = 'u8[2048]{0}', space=vmem, size = 0x800, scoped, tag = 'input window, operand 3, single buffered']
    #allocation6 [shape = 's32[1]{0}', space=sflag, size = 0x4, scoped, tag = 'scoped memory for tpu_custom_call.1']
    #allocation7 [shape = 'u8[131072]{0}', space=vmem, size = 0x20000, scoped, tag = 'input window, operand 4, single buffered']
    #allocation8 [shape = 'u8[512]{0}', space=vmem, size = 0x400, scoped, tag = 'input window, operand 5, single buffered']
    #allocation9 [shape = 's32[1]{0}', space=sflag, size = 0x4, scoped, tag = 'scoped memory for tpu_custom_call.1']
    #allocation10 [shape = 'u8[12288]{0}', space=vmem, size = 0x3000, scoped, tag = 'output window, operand 0, single buffered']
    %17 = vsyncpa [#allocation3], 0
    %18 = vsyncpa [#allocation6], 0
    %19 = vsyncpa [#allocation9], 0
    %20 = vsyncpa [#allocation4], 0
    // Predicated region
    $region2: #{tpu_custom_call.1} parent=1 // pred_check
      _
    $region3: #{tpu_custom_call.1} parent=1 // pred_check_branch
      %22 = sbr.rel (0) target = $region5
    $region4: #{tpu_custom_call.1} parent=1 // pred_region
      _
    $region5: #{tpu_custom_call.1} parent=1 // pred_fallthru
      _
    // Predicated region
    $region6: #{tpu_custom_call.1} parent=1 // pred_check
      _
    $region7: #{tpu_custom_call.1} parent=1 // pred_check_branch
      %24 = sbr.rel (0) target = $region9
    $region8: #{tpu_custom_call.1} parent=1 // pred_region
      _
    $region9: #{tpu_custom_call.1} parent=1 // pred_fallthru
      _
    // Predicated region
    $region10: #{tpu_custom_call.1} parent=1 // pred_check
      _
    $region11: #{tpu_custom_call.1} parent=1 // pred_check_branch
      %26 = sbr.rel (0) target = $region13
    $region12: #{tpu_custom_call.1} parent=1 // pred_region
      %28 = vsyncadd [#allocation3], 0
      %s30 = sshll.u32 %s2, 4
      %s31 = int_to_ptr.hbm [resolvable:$true] %s30
      %s32 = sshll.u32 [#allocation2], 4
      %s33 = int_to_ptr.vmem [resolvable:$true] %s32
      %35 = dma.hbm_to_vmem [thread:$0]  %s31, 128, %s33, [#allocation3]
    $region13: #{tpu_custom_call.1} parent=1 // pred_fallthru
      _
    // Predicated region
    $region14: #{tpu_custom_call.1} parent=1 // pred_check
      _
    $region15: #{tpu_custom_call.1} parent=1 // pred_check_branch
      %37 = sbr.rel (0) target = $region17
    $region16: #{tpu_custom_call.1} parent=1 // pred_region
      %39 = vsyncadd [#allocation6], 0
      %s41 = sshll.u32 %s3, 4
      %s42 = int_to_ptr.hbm [resolvable:$true] %s41
      %s43 = sshll.u32 [#allocation5], 4
      %s44 = int_to_ptr.vmem [resolvable:$true] %s43
      %46 = dma.hbm_to_vmem [thread:$0]  %s42, 64, %s44, [#allocation6]
    $region17: #{tpu_custom_call.1} parent=1 // pred_fallthru
      _
    // Predicated region
    $region18: #{tpu_custom_call.1} parent=1 // pred_check
      _
    $region19: #{tpu_custom_call.1} parent=1 // pred_check_branch
      %48 = sbr.rel (0) target = $region21
    $region20: #{tpu_custom_call.1} parent=1 // pred_region
      %50 = vsyncadd [#allocation6], 0
      %s51 = sshll.u32 %s4, 4
      %s52 = int_to_ptr.hbm [resolvable:$true] %s51
      %s53 = sshll.u32 [#allocation7], 4
      %s54 = int_to_ptr.vmem [resolvable:$true] %s53
      %59 = dma.hbm_to_vmem [thread:$0]  %s52, 4096, %s54, [#allocation6], 64, 64, 4
    $region21: #{tpu_custom_call.1} parent=1 // pred_fallthru
      _
    // Predicated region
    $region22: #{tpu_custom_call.1} parent=1 // pred_check
      _
    $region23: #{tpu_custom_call.1} parent=1 // pred_check_branch
      %61 = sbr.rel (0) target = $region25
    $region24: #{tpu_custom_call.1} parent=1 // pred_region
      %63 = vsyncadd [#allocation9], 0
      %s65 = sshll.u32 %s5, 4
      %s66 = int_to_ptr.hbm [resolvable:$true] %s65
      %s67 = sshll.u32 [#allocation8], 4
      %s68 = int_to_ptr.vmem [resolvable:$true] %s67
      %70 = dma.hbm_to_vmem [thread:$0]  %s66, 16, %s68, [#allocation9]
    $region25: #{tpu_custom_call.1} parent=1 // pred_fallthru
      _
    // Predicated region
    $region26: #{tpu_custom_call.1} parent=1 // pred_check
      _
    $region27: #{tpu_custom_call.1} parent=1 // pred_check_branch
      %72 = sbr.rel (0) target = $region29
    $region28: #{tpu_custom_call.1} parent=1 // pred_region
      _
    $region29: #{tpu_custom_call.1} parent=1 // pred_fallthru
      _
    // Predicated region
    $region30: #{tpu_custom_call.1} parent=1 // pred_check
      _
    $region31: #{tpu_custom_call.1} parent=1 // pred_check_branch
      %74 = sbr.rel (0) target = $region33
    $region32: #{tpu_custom_call.1} parent=1 // pred_region
      _
    $region33: #{tpu_custom_call.1} parent=1 // pred_fallthru
      _
    // Predicated region
    $region34: #{tpu_custom_call.1} parent=1 // pred_check
      _
    $region35: #{tpu_custom_call.1} parent=1 // pred_check_branch
      %76 = sbr.rel (0) target = $region37
    $region36: #{tpu_custom_call.1} parent=1 // pred_region
      _
    $region37: #{tpu_custom_call.1} parent=1 // pred_fallthru
      _
    // Predicated region
    $region38: #{tpu_custom_call.1} parent=1 // pred_check
      _
    $region39: #{tpu_custom_call.1} parent=1 // pred_check_branch
      %78 = sbr.rel (0) target = $region41
    $region40: #{tpu_custom_call.1} parent=1 // pred_region
      _
    $region41: #{tpu_custom_call.1} parent=1 // pred_fallthru
      _
    // Predicated region
    $region42: #{tpu_custom_call.1} parent=1 // pred_check
      _
    $region43: #{tpu_custom_call.1} parent=1 // pred_check_branch
      %80 = sbr.rel (0) target = $region45
    $region44: #{tpu_custom_call.1} parent=1 // pred_region
      _
    $region45: #{tpu_custom_call.1} parent=1 // pred_fallthru
      _
    // Predicated region
    $region46: #{tpu_custom_call.1} parent=1 // pred_check
      _
    $region47: #{tpu_custom_call.1} parent=1 // pred_check_branch
      %82 = sbr.rel (0) target = $region49
    $region48: #{tpu_custom_call.1} parent=1 // pred_region
      _
    $region49: #{tpu_custom_call.1} parent=1 // pred_fallthru
      _
    // Predicated region
    $region50: #{tpu_custom_call.1} parent=1 // pred_check
      _
    $region51: #{tpu_custom_call.1} parent=1 // pred_check_branch
      %84 = sbr.rel (0) target = $region53
    $region52: #{tpu_custom_call.1} parent=1 // pred_region
      %86 = dma.done [#allocation3], 128
    $region53: #{tpu_custom_call.1} parent=1 // pred_fallthru
      _
    // Predicated region
    $region54: #{tpu_custom_call.1} parent=1 // pred_check
      _
    $region55: #{tpu_custom_call.1} parent=1 // pred_check_branch
      %88 = sbr.rel (0) target = $region57
    $region56: #{tpu_custom_call.1} parent=1 // pred_region
      %90 = dma.done [#allocation6], 64
    $region57: #{tpu_custom_call.1} parent=1 // pred_fallthru
      _
    // Predicated region
    $region58: #{tpu_custom_call.1} parent=1 // pred_check
      _
    $region59: #{tpu_custom_call.1} parent=1 // pred_check_branch
      %92 = sbr.rel (0) target = $region61
    $region60: #{tpu_custom_call.1} parent=1 // pred_region
      %94 = dma.done [#allocation6], 4096
    $region61: #{tpu_custom_call.1} parent=1 // pred_fallthru
      _
    // Predicated region
    $region62: #{tpu_custom_call.1} parent=1 // pred_check
      _
    $region63: #{tpu_custom_call.1} parent=1 // pred_check_branch
      %96 = sbr.rel (0) target = $region65
    $region64: #{tpu_custom_call.1} parent=1 // pred_region
      %98 = dma.done [#allocation9], 16
    $region65: #{tpu_custom_call.1} parent=1 // pred_fallthru
      _
    %v100 = vld [vmem:[%s0] sm:$0xff]
    %v101 = vld [vmem:[%s0 + $0x8] sm:$0xff]
    %v102 = vld [vmem:[%s0 + $0x10] sm:$0xff]
    %v103 = vld [vmem:[%s0 + $0x18] sm:$0xff]
    %v104 = vld [vmem:[%s0 + $0x20] sm:$0xff]
    %v105 = vld [vmem:[%s0 + $0x28] sm:$0xff]
    %v106 = vld [vmem:[%s0 + $0x30] sm:$0xff]
    %v107 = vld [vmem:[%s0 + $0x38] sm:$0xff]
    %116 = vst [vmem:[#allocation1] ss:$2 sm:$0xff] %v100
    %v117 = vld.sshfl [vmem:[#allocation1] sm:$0xff pattern:$0x75316420]
    %v118 = vld.sshfl [vmem:[#allocation1 + $0x8] sm:$0xff pattern:$0x75316420]
    %s119 = scalar_lea.vmem [#allocation1], 16
    %120 = vst [vmem:[%s119] ss:$2 sm:$0xff] %v101
    %v121 = vld.sshfl [vmem:[#allocation1 + $0x10] sm:$0xff pattern:$0x75316420]
    %v122 = vld.sshfl [vmem:[#allocation1 + $0x18] sm:$0xff pattern:$0x75316420]
    %s123 = scalar_lea.vmem [#allocation1], 32
    %124 = vst [vmem:[%s123] ss:$2 sm:$0xff] %v102
    %v125 = vld.sshfl [vmem:[#allocation1 + $0x20] sm:$0xff pattern:$0x75316420]
    %v126 = vld.sshfl [vmem:[#allocation1 + $0x28] sm:$0xff pattern:$0x75316420]
    %s127 = scalar_lea.vmem [#allocation1], 48
    %128 = vst [vmem:[%s127] ss:$2 sm:$0xff] %v103
    %v129 = vld.sshfl [vmem:[#allocation1 + $0x30] sm:$0xff pattern:$0x75316420]
    %v130 = vld.sshfl [vmem:[#allocation1 + $0x38] sm:$0xff pattern:$0x75316420]
    %131 = vst [vmem:[#allocation1] ss:$2 sm:$0xff] %v104
    %v132 = vld.sshfl [vmem:[#allocation1] sm:$0xff pattern:$0x75316420]
    %v133 = vld.sshfl [vmem:[#allocation1 + $0x8] sm:$0xff pattern:$0x75316420]
    %134 = vst [vmem:[%s119] ss:$2 sm:$0xff] %v105
    %v135 = vld.sshfl [vmem:[#allocation1 + $0x10] sm:$0xff pattern:$0x75316420]
    %v136 = vld.sshfl [vmem:[#allocation1 + $0x18] sm:$0xff pattern:$0x75316420]
    %137 = vst [vmem:[%s123] ss:$2 sm:$0xff] %v106
    %v138 = vld.sshfl [vmem:[#allocation1 + $0x20] sm:$0xff pattern:$0x75316420]
    %v139 = vld.sshfl [vmem:[#allocation1 + $0x28] sm:$0xff pattern:$0x75316420]
    %140 = vst [vmem:[%s127] ss:$2 sm:$0xff] %v107
    %v141 = vld.sshfl [vmem:[#allocation1 + $0x30] sm:$0xff pattern:$0x75316420]
    %v142 = vld.sshfl [vmem:[#allocation1 + $0x38] sm:$0xff pattern:$0x75316420]
    %vm159 = vcmask 1043456
    %v160 = vsel %vm159, %v117, 0.0
    %v161 = vsel %vm159, %v118, 0.0
    %v162 = vadd.f32 %v160, %v161
    %163 = vadd.xlane.f32.xlu0 %v162
    %v164 = vpop.xlane.xlu0 %163
    %v165 = vsel %vm159, %v121, 0.0
    %v166 = vsel %vm159, %v122, 0.0
    %v167 = vadd.f32 %v165, %v166
    %168 = vadd.xlane.f32.xlu0 %v167
    %v169 = vpop.xlane.xlu0 %168
    %v170 = vsel %vm159, %v125, 0.0
    %v171 = vsel %vm159, %v126, 0.0
    %v172 = vadd.f32 %v170, %v171
    %173 = vadd.xlane.f32.xlu0 %v172
    %v174 = vpop.xlane.xlu0 %173
    %v175 = vsel %vm159, %v129, 0.0
    %v176 = vsel %vm159, %v130, 0.0
    %v177 = vadd.f32 %v175, %v176
    %178 = vadd.xlane.f32.xlu0 %v177
    %v179 = vpop.xlane.xlu0 %178
    %v180 = vsel %vm159, %v132, 0.0
    %v181 = vsel %vm159, %v133, 0.0
    %v182 = vadd.f32 %v180, %v181
    %183 = vadd.xlane.f32.xlu0 %v182
    %v184 = vpop.xlane.xlu0 %183
    %v185 = vsel %vm159, %v135, 0.0
    %v186 = vsel %vm159, %v136, 0.0
    %v187 = vadd.f32 %v185, %v186
    %188 = vadd.xlane.f32.xlu0 %v187
    %v189 = vpop.xlane.xlu0 %188
    %v190 = vsel %vm159, %v138, 0.0
    %v191 = vsel %vm159, %v139, 0.0
    %v192 = vadd.f32 %v190, %v191
    %193 = vadd.xlane.f32.xlu0 %v192
    %v194 = vpop.xlane.xlu0 %193
    %v195 = vsel %vm159, %v141, 0.0
    %v196 = vsel %vm159, %v142, 0.0
    %v197 = vadd.f32 %v195, %v196
    %198 = vadd.xlane.f32.xlu0 %v197
    %v199 = vpop.xlane.xlu0 %198
    %v200 = vrcp.pop 256.0
    %v201 = vmul.f32 256.0, %v200
    %v202 = vsub.f32 1.0, %v201
    %v203 = vmul.f32 %v200, %v202
    %v204 = vadd.f32 %v200, %v203
    %vm205 = vweird.f32 %v200
    %v206 = vsel %vm205, %v200, %v204
    %v207 = vmul.f32 %v164, %v206
    %v208 = vmul.f32 %v169, %v206
    %v209 = vmul.f32 %v174, %v206
    %v210 = vmul.f32 %v179, %v206
    %v211 = vmul.f32 %v184, %v206
    %v212 = vmul.f32 %v189, %v206
    %v213 = vmul.f32 %v194, %v206
    %v214 = vmul.f32 %v199, %v206
    %v215 = vpack.c.bf16 %v207, %v207
    %v216 = vpack.c.bf16 %v208, %v208
    %v217 = vpack.c.bf16 %v209, %v209
    %v218 = vpack.c.bf16 %v210, %v210
    %v219 = vpack.c.bf16 %v211, %v211
    %v220 = vpack.c.bf16 %v212, %v212
    %v221 = vpack.c.bf16 %v213, %v213
    %v222 = vpack.c.bf16 %v214, %v214
    %v223 = vld [vmem:[#allocation2] sm:$0xff]
    %v224 = vld [vmem:[#allocation5] sm:$0xf]
    %v226 = vperm.slane %v224, 0
    %v227 = vperm.slane %v224, 1
    %v228 = vperm.slane %v224, 2
    %v229 = vperm.slane %v224, 3
    %v242 = vunpack.c.l.b16 %v215
    %v243 = vunpack.c.l.b16 %v216
    %v244 = vunpack.c.l.b16 %v217
    %v245 = vunpack.c.l.b16 %v218
    %v246 = vunpack.c.l.b16 %v219
    %v247 = vunpack.c.l.b16 %v220
    %v248 = vunpack.c.l.b16 %v221
    %v249 = vunpack.c.l.b16 %v222
    %v250 = vlaneseq
    %v251 = vand.u32 %v250, 127
    %v252 = vperm.slane %v242, %v251
    %v253 = vperm.slane %v243, %v251
    %v254 = vperm.slane %v244, %v251
    %v255 = vperm.slane %v245, %v251
    %v256 = vperm.slane %v246, %v251
    %v257 = vperm.slane %v247, %v251
    %v258 = vperm.slane %v248, %v251
    %v259 = vperm.slane %v249, %v251
    %vm260 = vcmask 1041409
    %v261 = vsel %vm260, %v253, %v252
    %vm262 = vcmask 1042434
    %v263 = vsel %vm262, %v254, %v261
    %vm264 = vcmask 1043459
    %v265 = vsel %vm264, %v255, %v263
    %vm266 = vcmask 1044484
    %v267 = vsel %vm266, %v256, %v265
    %vm268 = vcmask 1045509
    %v269 = vsel %vm268, %v257, %v267
    %vm270 = vcmask 1046534
    %v271 = vsel %vm270, %v258, %v269
    %vm272 = vcmask 1047559
    %v273 = vsel %vm272, %v259, %v271
    %v274 = vpack.c.b16 %v273, %v273
    %276 = vst [vmem:[#allocation1] ss:$4 sm:$0xff] %v223
    %v277 = vld.sshfl [vmem:[#allocation1] sm:$0xff pattern:$0x73625140]
    %v278 = vld.sshfl [vmem:[#allocation1 + $0x8] sm:$0xff pattern:$0x73625140]
    %v279 = vld.sshfl [vmem:[#allocation1 + $0x10] sm:$0xff pattern:$0x73625140]
    %v280 = vld.sshfl [vmem:[#allocation1 + $0x18] sm:$0xff pattern:$0x73625140]
    %vm281 = vcmask 31744
    %v283 = vsel %vm281, %v274, 0
    %vm285 = vcmask 1041408
    %v286 = vsel %vm285, %v277, 0
    %v288 = vsel %vm285, %v278, 0
    %v290 = vsel %vm285, %v279, 0
    %v292 = vsel %vm285, %v280, 0
    %294 = vmatpush.bf16.msra.mxu0 0
    %295 = vmatpush.bf16.msra.mxu0 0
    %296 = vmatpush.bf16.msra.mxu0 0
    %297 = vmatpush.bf16.msra.mxu0 0
    %298 = vmatpush.bf16.msra.mxu0 0
    %299 = vmatpush.bf16.msra.mxu0 0
    %300 = vmatpush.bf16.msra.mxu0 0
    %301 = vmatpush.bf16.msra.mxu0 %v286
    %302 = vmatmul.bf16.gmra.mxu0 %v283
    %v303 = vpop.f32.mrf.mxu0
    %v304 = vadd.f32 %v226, %v303
    %v305 = vpop.f32.mrf.mxu0
    %306 = vdwg.mxu0
    %307 = vmatpush.bf16.msra.mxu0 0
    %308 = vmatpush.bf16.msra.mxu0 0
    %309 = vmatpush.bf16.msra.mxu0 0
    %310 = vmatpush.bf16.msra.mxu0 0
    %311 = vmatpush.bf16.msra.mxu0 0
    %312 = vmatpush.bf16.msra.mxu0 0
    %313 = vmatpush.bf16.msra.mxu0 0
    %314 = vmatpush.bf16.msra.mxu0 %v288
    %315 = vmatmul.bf16.gmra.mxu0 %v283
    %v316 = vpop.f32.mrf.mxu0
    %v317 = vadd.f32 %v227, %v316
    %v318 = vpop.f32.mrf.mxu0
    %319 = vdwg.mxu0
    %320 = vmatpush.bf16.msra.mxu0 0
    %321 = vmatpush.bf16.msra.mxu0 0
    %322 = vmatpush.bf16.msra.mxu0 0
    %323 = vmatpush.bf16.msra.mxu0 0
    %324 = vmatpush.bf16.msra.mxu0 0
    %325 = vmatpush.bf16.msra.mxu0 0
    %326 = vmatpush.bf16.msra.mxu0 0
    %327 = vmatpush.bf16.msra.mxu0 %v290
    %328 = vmatmul.bf16.gmra.mxu0 %v283
    %v329 = vpop.f32.mrf.mxu0
    %v330 = vadd.f32 %v228, %v329
    %v331 = vpop.f32.mrf.mxu0
    %332 = vdwg.mxu0
    %333 = vmatpush.bf16.msra.mxu0 0
    %334 = vmatpush.bf16.msra.mxu0 0
    %335 = vmatpush.bf16.msra.mxu0 0
    %336 = vmatpush.bf16.msra.mxu0 0
    %337 = vmatpush.bf16.msra.mxu0 0
    %338 = vmatpush.bf16.msra.mxu0 0
    %339 = vmatpush.bf16.msra.mxu0 0
    %340 = vmatpush.bf16.msra.mxu0 %v292
    %341 = vmatmul.bf16.gmra.mxu0 %v283
    %v342 = vpop.f32.mrf.mxu0
    %v343 = vadd.f32 %v229, %v342
    %v344 = vpop.f32.mrf.mxu0
    %345 = vdwg.mxu0
    %v346 = vmax.f32 %v304, 0.0
    %v347 = vmax.f32 %v317, 0.0
    %v348 = vmax.f32 %v330, 0.0
    %v349 = vmax.f32 %v343, 0.0
    %v350 = vpack.c.bf16 %v346, %v346
    %v351 = vpack.c.bf16 %v347, %v347
    %v352 = vpack.c.bf16 %v348, %v348
    %v353 = vpack.c.bf16 %v349, %v349
    %v354 = vld [vmem:[#allocation7] sm:$0xf]
    %v355 = vld [vmem:[#allocation7 + $0x4] sm:$0xf]
    %v356 = vld [vmem:[#allocation7 + $0x8] sm:$0xf]
    %v357 = vld [vmem:[#allocation7 + $0xc] sm:$0xf]
    %v358 = vld [vmem:[#allocation7 + $0x10] sm:$0xf]
    %v359 = vld [vmem:[#allocation7 + $0x14] sm:$0xf]
    %v360 = vld [vmem:[#allocation7 + $0x18] sm:$0xf]
    %v361 = vld [vmem:[#allocation7 + $0x1c] sm:$0xf]
    %v362 = vld [vmem:[#allocation7 + $0x20] sm:$0xf]
    %v363 = vld [vmem:[#allocation7 + $0x24] sm:$0xf]
    %v364 = vld [vmem:[#allocation7 + $0x28] sm:$0xf]
    %v365 = vld [vmem:[#allocation7 + $0x2c] sm:$0xf]
    %v366 = vld [vmem:[#allocation7 + $0x30] sm:$0xf]
    %v367 = vld [vmem:[#allocation7 + $0x34] sm:$0xf]
    %v368 = vld [vmem:[#allocation7 + $0x38] sm:$0xf]
    %v369 = vld [vmem:[#allocation7 + $0x3c] sm:$0xf]
    %v370 = vld [vmem:[#allocation7 + $0x40] sm:$0xf]
    %v371 = vld [vmem:[#allocation7 + $0x44] sm:$0xf]
    %v372 = vld [vmem:[#allocation7 + $0x48] sm:$0xf]
    %v373 = vld [vmem:[#allocation7 + $0x4c] sm:$0xf]
    %v374 = vld [vmem:[#allocation7 + $0x50] sm:$0xf]
    %v375 = vld [vmem:[#allocation7 + $0x54] sm:$0xf]
    %v376 = vld [vmem:[#allocation7 + $0x58] sm:$0xf]
    %v377 = vld [vmem:[#allocation7 + $0x5c] sm:$0xf]
    %v378 = vld [vmem:[#allocation7 + $0x60] sm:$0xf]
    %v379 = vld [vmem:[#allocation7 + $0x64] sm:$0xf]
    %v380 = vld [vmem:[#allocation7 + $0x68] sm:$0xf]
    %v381 = vld [vmem:[#allocation7 + $0x6c] sm:$0xf]
    %v382 = vld [vmem:[#allocation7 + $0x70] sm:$0xf]
    %v383 = vld [vmem:[#allocation7 + $0x74] sm:$0xf]
    %v384 = vld [vmem:[#allocation7 + $0x78] sm:$0xf]
    %v385 = vld [vmem:[#allocation7 + $0x7c] sm:$0xf]
    %v386 = vld [vmem:[#allocation7 + $0x80] sm:$0xf]
    %v387 = vld [vmem:[#allocation7 + $0x84] sm:$0xf]
    %v388 = vld [vmem:[#allocation7 + $0x88] sm:$0xf]
    %v389 = vld [vmem:[#allocation7 + $0x8c] sm:$0xf]
    %v390 = vld [vmem:[#allocation7 + $0x90] sm:$0xf]
    %v391 = vld [vmem:[#allocation7 + $0x94] sm:$0xf]
    %v392 = vld [vmem:[#allocation7 + $0x98] sm:$0xf]
    %v393 = vld [vmem:[#allocation7 + $0x9c] sm:$0xf]
    %v394 = vld [vmem:[#allocation7 + $0xa0] sm:$0xf]
    %v395 = vld [vmem:[#allocation7 + $0xa4] sm:$0xf]
    %v396 = vld [vmem:[#allocation7 + $0xa8] sm:$0xf]
    %v397 = vld [vmem:[#allocation7 + $0xac] sm:$0xf]
    %v398 = vld [vmem:[#allocation7 + $0xb0] sm:$0xf]
    %v399 = vld [vmem:[#allocation7 + $0xb4] sm:$0xf]
    %v400 = vld [vmem:[#allocation7 + $0xb8] sm:$0xf]
    %v401 = vld [vmem:[#allocation7 + $0xbc] sm:$0xf]
    %v402 = vld [vmem:[#allocation7 + $0xc0] sm:$0xf]
    %v403 = vld [vmem:[#allocation7 + $0xc4] sm:$0xf]
    %v404 = vld [vmem:[#allocation7 + $0xc8] sm:$0xf]
    %v405 = vld [vmem:[#allocation7 + $0xcc] sm:$0xf]
    %v406 = vld [vmem:[#allocation7 + $0xd0] sm:$0xf]
    %v407 = vld [vmem:[#allocation7 + $0xd4] sm:$0xf]
    %v408 = vld [vmem:[#allocation7 + $0xd8] sm:$0xf]
    %v409 = vld [vmem:[#allocation7 + $0xdc] sm:$0xf]
    %v410 = vld [vmem:[#allocation7 + $0xe0] sm:$0xf]
    %v411 = vld [vmem:[#allocation7 + $0xe4] sm:$0xf]
    %v412 = vld [vmem:[#allocation7 + $0xe8] sm:$0xf]
    %v413 = vld [vmem:[#allocation7 + $0xec] sm:$0xf]
    %v414 = vld [vmem:[#allocation7 + $0xf0] sm:$0xf]
    %v415 = vld [vmem:[#allocation7 + $0xf4] sm:$0xf]
    %v416 = vld [vmem:[#allocation7 + $0xf8] sm:$0xf]
    %v417 = vld [vmem:[#allocation7 + $0xfc] sm:$0xf]
    %v418 = vld [vmem:[#allocation8] sm:$0x1]
    %v420 = vperm.slane %v418, 0
    %v486 = vunpack.c.l.b16 %v354
    %v487 = vunpack.c.l.b16 %v355
    %v488 = vunpack.c.l.b16 %v356
    %v489 = vunpack.c.l.b16 %v357
    %v490 = vunpack.c.l.b16 %v358
    %v491 = vunpack.c.l.b16 %v359
    %v492 = vunpack.c.l.b16 %v360
    %v493 = vunpack.c.l.b16 %v361
    %v494 = vunpack.c.l.b16 %v362
    %v495 = vunpack.c.l.b16 %v363
    %v496 = vunpack.c.l.b16 %v364
    %v497 = vunpack.c.l.b16 %v365
    %v498 = vunpack.c.l.b16 %v366
    %v499 = vunpack.c.l.b16 %v367
    %v500 = vunpack.c.l.b16 %v368
    %v501 = vunpack.c.l.b16 %v369
    %v502 = vunpack.c.l.b16 %v370
    %v503 = vunpack.c.l.b16 %v371
    %v504 = vunpack.c.l.b16 %v372
    %v505 = vunpack.c.l.b16 %v373
    %v506 = vunpack.c.l.b16 %v374
    %v507 = vunpack.c.l.b16 %v375
    %v508 = vunpack.c.l.b16 %v376
    %v509 = vunpack.c.l.b16 %v377
    %v510 = vunpack.c.l.b16 %v378
    %v511 = vunpack.c.l.b16 %v379
    %v512 = vunpack.c.l.b16 %v380
    %v513 = vunpack.c.l.b16 %v381
    %v514 = vunpack.c.l.b16 %v382
    %v515 = vunpack.c.l.b16 %v383
    %v516 = vunpack.c.l.b16 %v384
    %v517 = vunpack.c.l.b16 %v385
    %v518 = vunpack.c.l.b16 %v386
    %v519 = vunpack.c.l.b16 %v387
    %v520 = vunpack.c.l.b16 %v388
    %v521 = vunpack.c.l.b16 %v389
    %v522 = vunpack.c.l.b16 %v390
    %v523 = vunpack.c.l.b16 %v391
    %v524 = vunpack.c.l.b16 %v392
    %v525 = vunpack.c.l.b16 %v393
    %v526 = vunpack.c.l.b16 %v394
    %v527 = vunpack.c.l.b16 %v395
    %v528 = vunpack.c.l.b16 %v396
    %v529 = vunpack.c.l.b16 %v397
    %v530 = vunpack.c.l.b16 %v398
    %v531 = vunpack.c.l.b16 %v399
    %v532 = vunpack.c.l.b16 %v400
    %v533 = vunpack.c.l.b16 %v401
    %v534 = vunpack.c.l.b16 %v402
    %v535 = vunpack.c.l.b16 %v403
    %v536 = vunpack.c.l.b16 %v404
    %v537 = vunpack.c.l.b16 %v405
    %v538 = vunpack.c.l.b16 %v406
    %v539 = vunpack.c.l.b16 %v407
    %v540 = vunpack.c.l.b16 %v408
    %v541 = vunpack.c.l.b16 %v409
    %v542 = vunpack.c.l.b16 %v410
    %v543 = vunpack.c.l.b16 %v411
    %v544 = vunpack.c.l.b16 %v412
    %v545 = vunpack.c.l.b16 %v413
    %v546 = vunpack.c.l.b16 %v414
    %v547 = vunpack.c.l.b16 %v415
    %v548 = vunpack.c.l.b16 %v416
    %v549 = vunpack.c.l.b16 %v417
    %v550 = vpack.c.b16 %v487, %v486
    %v551 = vpack.c.b16 %v489, %v488
    %v552 = vpack.c.b16 %v491, %v490
    %v553 = vpack.c.b16 %v493, %v492
    %v554 = vpack.c.b16 %v495, %v494
    %v555 = vpack.c.b16 %v497, %v496
    %v556 = vpack.c.b16 %v499, %v498
    %v557 = vpack.c.b16 %v501, %v500
    %v558 = vpack.c.b16 %v503, %v502
    %v559 = vpack.c.b16 %v505, %v504
    %v560 = vpack.c.b16 %v507, %v506
    %v561 = vpack.c.b16 %v509, %v508
    %v562 = vpack.c.b16 %v511, %v510
    %v563 = vpack.c.b16 %v513, %v512
    %v564 = vpack.c.b16 %v515, %v514
    %v565 = vpack.c.b16 %v517, %v516
    %v566 = vpack.c.b16 %v519, %v518
    %v567 = vpack.c.b16 %v521, %v520
    %v568 = vpack.c.b16 %v523, %v522
    %v569 = vpack.c.b16 %v525, %v524
    %v570 = vpack.c.b16 %v527, %v526
    %v571 = vpack.c.b16 %v529, %v528
    %v572 = vpack.c.b16 %v531, %v530
    %v573 = vpack.c.b16 %v533, %v532
    %v574 = vpack.c.b16 %v535, %v534
    %v575 = vpack.c.b16 %v537, %v536
    %v576 = vpack.c.b16 %v539, %v538
    %v577 = vpack.c.b16 %v541, %v540
    %v578 = vpack.c.b16 %v543, %v542
    %v579 = vpack.c.b16 %v545, %v544
    %v580 = vpack.c.b16 %v547, %v546
    %v581 = vpack.c.b16 %v549, %v548
    %614 = vmatpush.bf16.msra.mxu0 %v557
    %615 = vmatpush.bf16.msra.mxu0 %v556
    %616 = vmatpush.bf16.msra.mxu0 %v555
    %617 = vmatpush.bf16.msra.mxu0 %v554
    %618 = vmatpush.bf16.msra.mxu0 %v553
    %619 = vmatpush.bf16.msra.mxu0 %v552
    %620 = vmatpush.bf16.msra.mxu0 %v551
    %621 = vmatpush.bf16.msra.mxu0 %v550
    %622 = vmatmul.bf16.gmra.mxu0 %v350
    %v623 = vpop.f32.mrf.mxu0
    %v624 = vadd.f32 %v420, %v623
    %v625 = vpop.f32.mrf.mxu0
    %626 = vdwg.mxu0
    %627 = vmatpush.bf16.msra.mxu0 %v565
    %628 = vmatpush.bf16.msra.mxu0 %v564
    %629 = vmatpush.bf16.msra.mxu0 %v563
    %630 = vmatpush.bf16.msra.mxu0 %v562
    %631 = vmatpush.bf16.msra.mxu0 %v561
    %632 = vmatpush.bf16.msra.mxu0 %v560
    %633 = vmatpush.bf16.msra.mxu0 %v559
    %634 = vmatpush.bf16.msra.mxu0 %v558
    %635 = vmatmul.bf16.gmra.mxu0 %v351
    %v636 = vpop.f32.mrf.mxu0
    %v637 = vadd.f32 %v624, %v636
    %v638 = vpop.f32.mrf.mxu0
    %639 = vdwg.mxu0
    %640 = vmatpush.bf16.msra.mxu0 %v573
    %641 = vmatpush.bf16.msra.mxu0 %v572
    %642 = vmatpush.bf16.msra.mxu0 %v571
    %643 = vmatpush.bf16.msra.mxu0 %v570
    %644 = vmatpush.bf16.msra.mxu0 %v569
    %645 = vmatpush.bf16.msra.mxu0 %v568
    %646 = vmatpush.bf16.msra.mxu0 %v567
    %647 = vmatpush.bf16.msra.mxu0 %v566
    %648 = vmatmul.bf16.gmra.mxu0 %v352
    %v649 = vpop.f32.mrf.mxu0
    %v650 = vadd.f32 %v637, %v649
    %v651 = vpop.f32.mrf.mxu0
    %652 = vdwg.mxu0
    %653 = vmatpush.bf16.msra.mxu0 %v581
    %654 = vmatpush.bf16.msra.mxu0 %v580
    %655 = vmatpush.bf16.msra.mxu0 %v579
    %656 = vmatpush.bf16.msra.mxu0 %v578
    %657 = vmatpush.bf16.msra.mxu0 %v577
    %658 = vmatpush.bf16.msra.mxu0 %v576
    %659 = vmatpush.bf16.msra.mxu0 %v575
    %660 = vmatpush.bf16.msra.mxu0 %v574
    %661 = vmatmul.bf16.gmra.mxu0 %v353
    %v662 = vpop.f32.mrf.mxu0
    %v663 = vadd.f32 %v650, %v662
    %v664 = vpop.f32.mrf.mxu0
    %665 = vdwg.mxu0
    %v666 = vmax.f32 %v663, 0.0
    %667 = vst [vmem:[#allocation10] sm:$0xff] %v666
    %v668 = vpack.c.bf16 %v666, %v666
    %v669 = vld [vmem:[%s6] sm:$0xff]
    %v670 = vld [vmem:[%s6 + $0x8] sm:$0xff]
    %v671 = vld [vmem:[%s6 + $0x10] sm:$0xff]
    %v672 = vld [vmem:[%s6 + $0x18] sm:$0xff]
    %v673 = vld [vmem:[%s6 + $0x20] sm:$0xff]
    %v674 = vld [vmem:[%s6 + $0x28] sm:$0xff]
    %v675 = vld [vmem:[%s6 + $0x30] sm:$0xff]
    %v676 = vld [vmem:[%s6 + $0x38] sm:$0xff]
    %v677 = vld [vmem:[%s6 + $0x40] sm:$0xff]
    %v678 = vld [vmem:[%s6 + $0x48] sm:$0xff]
    %v679 = vld [vmem:[%s6 + $0x50] sm:$0xff]
    %v680 = vld [vmem:[%s6 + $0x58] sm:$0xff]
    %v681 = vld [vmem:[%s6 + $0x60] sm:$0xff]
    %v682 = vld [vmem:[%s6 + $0x68] sm:$0xff]
    %v683 = vld [vmem:[%s6 + $0x70] sm:$0xff]
    %v684 = vld [vmem:[%s6 + $0x78] sm:$0xff]
    %v685 = vld [vmem:[%s7] sm:$0x3]
    %v687 = vperm.slane %v685, 0
    %v688 = vperm.slane %v685, 1
    %v707 = vunpack.c.l.b16 %v669
    %v708 = vunpack.c.h.b16 %v669
    %v709 = vunpack.c.l.b16 %v670
    %v710 = vunpack.c.h.b16 %v670
    %v711 = vunpack.c.l.b16 %v671
    %v712 = vunpack.c.h.b16 %v671
    %v713 = vunpack.c.l.b16 %v672
    %v714 = vunpack.c.h.b16 %v672
    %v715 = vunpack.c.l.b16 %v673
    %v716 = vunpack.c.h.b16 %v673
    %v717 = vunpack.c.l.b16 %v674
    %v718 = vunpack.c.h.b16 %v674
    %v719 = vunpack.c.l.b16 %v675
    %v720 = vunpack.c.h.b16 %v675
    %v721 = vunpack.c.l.b16 %v676
    %v722 = vunpack.c.h.b16 %v676
    %v723 = vunpack.c.l.b16 %v677
    %v724 = vunpack.c.h.b16 %v677
    %v725 = vunpack.c.l.b16 %v678
    %v726 = vunpack.c.h.b16 %v678
    %v727 = vunpack.c.l.b16 %v679
    %v728 = vunpack.c.h.b16 %v679
    %v729 = vunpack.c.l.b16 %v680
    %v730 = vunpack.c.h.b16 %v680
    %v731 = vunpack.c.l.b16 %v681
    %v732 = vunpack.c.h.b16 %v681
    %v733 = vunpack.c.l.b16 %v682
    %v734 = vunpack.c.h.b16 %v682
    %v735 = vunpack.c.l.b16 %v683
    %v736 = vunpack.c.h.b16 %v683
    %v737 = vunpack.c.l.b16 %v684
    %v738 = vunpack.c.h.b16 %v684
    %v739 = vpack.c.b16 %v709, %v707
    %v740 = vpack.c.b16 %v710, %v708
    %v741 = vpack.c.b16 %v713, %v711
    %v742 = vpack.c.b16 %v714, %v712
    %v743 = vpack.c.b16 %v717, %v715
    %v744 = vpack.c.b16 %v718, %v716
    %v745 = vpack.c.b16 %v721, %v719
    %v746 = vpack.c.b16 %v722, %v720
    %v747 = vpack.c.b16 %v725, %v723
    %v748 = vpack.c.b16 %v726, %v724
    %v749 = vpack.c.b16 %v729, %v727
    %v750 = vpack.c.b16 %v730, %v728
    %v751 = vpack.c.b16 %v733, %v731
    %v752 = vpack.c.b16 %v734, %v732
    %v753 = vpack.c.b16 %v737, %v735
    %v754 = vpack.c.b16 %v738, %v736
    %771 = vmatpush.bf16.msra.mxu0 %v753
    %772 = vmatpush.bf16.msra.mxu0 %v751
    %773 = vmatpush.bf16.msra.mxu0 %v749
    %774 = vmatpush.bf16.msra.mxu0 %v747
    %775 = vmatpush.bf16.msra.mxu0 %v745
    %776 = vmatpush.bf16.msra.mxu0 %v743
    %777 = vmatpush.bf16.msra.mxu0 %v741
    %778 = vmatpush.bf16.msra.mxu0 %v739
    %779 = vmatmul.bf16.gmra.mxu0 %v668
    %v780 = vpop.f32.mrf.mxu0
    %v781 = vadd.f32 %v687, %v780
    %v782 = vpop.f32.mrf.mxu0
    %783 = vdwg.mxu0
    %784 = vmatpush.bf16.msra.mxu0 %v754
    %785 = vmatpush.bf16.msra.mxu0 %v752
    %786 = vmatpush.bf16.msra.mxu0 %v750
    %787 = vmatpush.bf16.msra.mxu0 %v748
    %788 = vmatpush.bf16.msra.mxu0 %v746
    %789 = vmatpush.bf16.msra.mxu0 %v744
    %790 = vmatpush.bf16.msra.mxu0 %v742
    %791 = vmatpush.bf16.msra.mxu0 %v740
    %792 = vmatmul.bf16.gmra.mxu0 %v668
    %v793 = vpop.f32.mrf.mxu0
    %v794 = vadd.f32 %v688, %v793
    %v795 = vpop.f32.mrf.mxu0
    %796 = vdwg.mxu0
    %v797 = vtanh.pop %v781
    %vm798 = vcmask 261120
    %v799 = vsel %vm798, %v794, -inf
    %800 = vmax.xlane.f32.xlu0 %v799
    %v801 = vpop.xlane.xlu0 %800
    %v802 = vsub.f32 %v794, %v801
    %v803 = vmul.f32 %v802, 1.442695
    %v804 = vpow.pop %v803
    %v805 = vsel %vm798, %v804, 0.0
    %806 = vadd.xlane.f32.xlu0 %v805
    %v807 = vpop.xlane.xlu0 %806
    %v808 = vrcp.pop %v807
    %v809 = vmul.f32 %v804, %v808
    %v810 = vpack.c.bf16 %v809, %v809
    %v811 = vld [vmem:[%s1] sm:$0xf]
    %v812 = vld [vmem:[%s1 + $0x4] sm:$0xf]
    %v813 = vld [vmem:[%s1 + $0x8] sm:$0xf]
    %v814 = vld [vmem:[%s1 + $0xc] sm:$0xf]
    %v819 = vunpack.c.l.b16 %v811
    %v820 = vunpack.c.l.b16 %v812
    %v821 = vunpack.c.l.b16 %v813
    %v822 = vunpack.c.l.b16 %v814
    %v823 = vpack.c.b16 %v820, %v819
    %v824 = vpack.c.b16 %v822, %v821
    %v828 = vsel %vm798, %v810, 0
    %830 = vmatpush.bf16.msra.mxu0 0
    %831 = vmatpush.bf16.msra.mxu0 0
    %832 = vmatpush.bf16.msra.mxu0 0
    %833 = vmatpush.bf16.msra.mxu0 0
    %834 = vmatpush.bf16.msra.mxu0 0
    %835 = vmatpush.bf16.msra.mxu0 0
    %836 = vmatpush.bf16.msra.mxu0 %v824
    %837 = vmatpush.bf16.msra.mxu0 %v823
    %838 = vmatmul.bf16.gmra.mxu0 %v828
    %v839 = vpop.f32.mrf.mxu0
    %v840 = vadd.f32 0.0, %v839
    %v841 = vpop.f32.mrf.mxu0
    %842 = vdwg.mxu0
    %v843 = vmul.f32 %v797, %v840
    %v844 = vadd.f32 %v666, %v843
    %v845 = vpack.c.bf16 %v844, %v844
    %v846 = vld [vmem:[%s8] sm:$0xf]
    %v847 = vld [vmem:[%s8 + $0x4] sm:$0xf]
    %v848 = vld [vmem:[%s8 + $0x8] sm:$0xf]
    %v849 = vld [vmem:[%s8 + $0xc] sm:$0xf]
    %v850 = vld [vmem:[%s8 + $0x10] sm:$0xf]
    %v851 = vld [vmem:[%s8 + $0x14] sm:$0xf]
    %v852 = vld [vmem:[%s8 + $0x18] sm:$0xf]
    %v853 = vld [vmem:[%s8 + $0x1c] sm:$0xf]
    %v854 = vld [vmem:[%s8 + $0x20] sm:$0xf]
    %v855 = vld [vmem:[%s8 + $0x24] sm:$0xf]
    %v856 = vld [vmem:[%s8 + $0x28] sm:$0xf]
    %v857 = vld [vmem:[%s8 + $0x2c] sm:$0xf]
    %v858 = vld [vmem:[%s8 + $0x30] sm:$0xf]
    %v859 = vld [vmem:[%s8 + $0x34] sm:$0xf]
    %v860 = vld [vmem:[%s8 + $0x38] sm:$0xf]
    %v861 = vld [vmem:[%s8 + $0x3c] sm:$0xf]
    %v862 = vld [vmem:[%s9] sm:$0x1]
    %v864 = vperm.slane %v862, 0
    %v882 = vunpack.c.l.b16 %v846
    %v883 = vunpack.c.l.b16 %v847
    %v884 = vunpack.c.l.b16 %v848
    %v885 = vunpack.c.l.b16 %v849
    %v886 = vunpack.c.l.b16 %v850
    %v887 = vunpack.c.l.b16 %v851
    %v888 = vunpack.c.l.b16 %v852
    %v889 = vunpack.c.l.b16 %v853
    %v890 = vunpack.c.l.b16 %v854
    %v891 = vunpack.c.l.b16 %v855
    %v892 = vunpack.c.l.b16 %v856
    %v893 = vunpack.c.l.b16 %v857
    %v894 = vunpack.c.l.b16 %v858
    %v895 = vunpack.c.l.b16 %v859
    %v896 = vunpack.c.l.b16 %v860
    %v897 = vunpack.c.l.b16 %v861
    %v898 = vpack.c.b16 %v883, %v882
    %v899 = vpack.c.b16 %v885, %v884
    %v900 = vpack.c.b16 %v887, %v886
    %v901 = vpack.c.b16 %v889, %v888
    %v902 = vpack.c.b16 %v891, %v890
    %v903 = vpack.c.b16 %v893, %v892
    %v904 = vpack.c.b16 %v895, %v894
    %v905 = vpack.c.b16 %v897, %v896
    %914 = vmatpush.bf16.msra.mxu0 %v905
    %915 = vmatpush.bf16.msra.mxu0 %v904
    %916 = vmatpush.bf16.msra.mxu0 %v903
    %917 = vmatpush.bf16.msra.mxu0 %v902
    %918 = vmatpush.bf16.msra.mxu0 %v901
    %919 = vmatpush.bf16.msra.mxu0 %v900
    %920 = vmatpush.bf16.msra.mxu0 %v899
    %921 = vmatpush.bf16.msra.mxu0 %v898
    %922 = vmatmul.bf16.gmra.mxu0 %v845
    %v923 = vpop.f32.mrf.mxu0
    %v924 = vadd.f32 %v864, %v923
    %v925 = vpop.f32.mrf.mxu0
    %926 = vdwg.mxu0
    %v927 = vtanh.pop %v924
    %928 = vst [vmem:[#allocation10 + $0x8] sm:$0xff] %v927
    %v929 = vpack.c.bf16 %v927, %v927
    %v930 = vld [vmem:[%s10] sm:$0xf]
    %v931 = vld [vmem:[%s10 + $0x4] sm:$0xf]
    %v932 = vld [vmem:[%s10 + $0x8] sm:$0xf]
    %v933 = vld [vmem:[%s10 + $0xc] sm:$0xf]
    %v934 = vld [vmem:[%s10 + $0x10] sm:$0xf]
    %v935 = vld [vmem:[%s10 + $0x14] sm:$0xf]
    %v936 = vld [vmem:[%s10 + $0x18] sm:$0xf]
    %v937 = vld [vmem:[%s10 + $0x1c] sm:$0xf]
    %v938 = vld [vmem:[%s10 + $0x20] sm:$0xf]
    %v939 = vld [vmem:[%s10 + $0x24] sm:$0xf]
    %v940 = vld [vmem:[%s10 + $0x28] sm:$0xf]
    %v941 = vld [vmem:[%s10 + $0x2c] sm:$0xf]
    %v942 = vld [vmem:[%s10 + $0x30] sm:$0xf]
    %v943 = vld [vmem:[%s10 + $0x34] sm:$0xf]
    %v944 = vld [vmem:[%s10 + $0x38] sm:$0xf]
    %v945 = vld [vmem:[%s10 + $0x3c] sm:$0xf]
    %v946 = vld [vmem:[%s11] sm:$0x1]
    %v948 = vperm.slane %v946, 0
    %v966 = vunpack.c.l.b16 %v930
    %v967 = vunpack.c.l.b16 %v931
    %v968 = vunpack.c.l.b16 %v932
    %v969 = vunpack.c.l.b16 %v933
    %v970 = vunpack.c.l.b16 %v934
    %v971 = vunpack.c.l.b16 %v935
    %v972 = vunpack.c.l.b16 %v936
    %v973 = vunpack.c.l.b16 %v937
    %v974 = vunpack.c.l.b16 %v938
    %v975 = vunpack.c.l.b16 %v939
    %v976 = vunpack.c.l.b16 %v940
    %v977 = vunpack.c.l.b16 %v941
    %v978 = vunpack.c.l.b16 %v942
    %v979 = vunpack.c.l.b16 %v943
    %v980 = vunpack.c.l.b16 %v944
    %v981 = vunpack.c.l.b16 %v945
    %v982 = vpack.c.b16 %v967, %v966
    %v983 = vpack.c.b16 %v969, %v968
    %v984 = vpack.c.b16 %v971, %v970
    %v985 = vpack.c.b16 %v973, %v972
    %v986 = vpack.c.b16 %v975, %v974
    %v987 = vpack.c.b16 %v977, %v976
    %v988 = vpack.c.b16 %v979, %v978
    %v989 = vpack.c.b16 %v981, %v980
    %998 = vmatpush.bf16.msra.mxu0 %v989
    %999 = vmatpush.bf16.msra.mxu0 %v988
    %1000 = vmatpush.bf16.msra.mxu0 %v987
    %1001 = vmatpush.bf16.msra.mxu0 %v986
    %1002 = vmatpush.bf16.msra.mxu0 %v985
    %1003 = vmatpush.bf16.msra.mxu0 %v984
    %1004 = vmatpush.bf16.msra.mxu0 %v983
    %1005 = vmatpush.bf16.msra.mxu0 %v982
    %1006 = vmatmul.bf16.gmra.mxu0 %v929
    %v1007 = vpop.f32.mrf.mxu0
    %v1008 = vadd.f32 %v948, %v1007
    %v1009 = vpop.f32.mrf.mxu0
    %1010 = vdwg.mxu0
    %1011 = vmax.xlane.f32.xlu0 %v1008
    %v1012 = vpop.xlane.xlu0 %1011
    %v1013 = vsub.f32 %v1008, %v1012
    %v1014 = vmul.f32 %v1013, 1.442695
    %v1015 = vpow.pop %v1014
    %1016 = vadd.xlane.f32.xlu0 %v1015
    %v1017 = vpop.xlane.xlu0 %1016
    %v1018 = vrcp.pop %v1017
    %v1019 = vmul.f32 %v1017, %v1018
    %v1020 = vsub.f32 1.0, %v1019
    %v1021 = vmul.f32 %v1018, %v1020
    %v1022 = vadd.f32 %v1018, %v1021
    %vm1023 = vweird.f32 %v1017
    %vm1024 = vweird.f32 %v1018
    %vm1025 = vmor %vm1023, %vm1024
    %v1026 = vsel %vm1025, %v1018, %v1022
    %v1027 = vand.u32 2147483647, %v1017
    %vm1028 = vcmp.eq.f32.partialorder %v1027, 8.507059e+37
    %v1029 = vand.u32 %v1017, 2147483648
    %v1030 = vor.u32 1.1754944e-38, %v1029
    %v1031 = vsel %vm1028, %v1030, %v1026
    %v1032 = vmul.f32 %v1015, %v1031
    %1033 = vst [vmem:[#allocation10 + $0x10] sm:$0xff] %v1032
    // Predicated region
    $region66: #{tpu_custom_call.1} parent=1 // pred_check
      _
    $region67: #{tpu_custom_call.1} parent=1 // pred_check_branch
      %1035 = sbr.rel (0) target = $region69
    $region68: #{tpu_custom_call.1} parent=1 // pred_region
      %1037 = vsyncadd [#allocation4], 0
      %s1039 = sshll.u32 [#allocation10], 4
      %s1040 = int_to_ptr.vmem [resolvable:$true] %s1039
      %s1041 = sshll.u32 %s12, 4
      %s1042 = int_to_ptr.hbm [resolvable:$true] %s1041
      %1044 = dma.vmem_to_hbm [thread:$0]  %s1040, 384, %s1042, [#allocation4]
    $region69: #{tpu_custom_call.1} parent=1 // pred_fallthru
      _
    // Predicated region
    $region70: #{tpu_custom_call.1} parent=1 // pred_check
      _
    $region71: #{tpu_custom_call.1} parent=1 // pred_check_branch
      %1046 = sbr.rel (0) target = $region73
    $region72: #{tpu_custom_call.1} parent=1 // pred_region
      %1048 = dma.done [#allocation4], 384
    $region73: #{tpu_custom_call.1} parent=1 // pred_fallthru
      _
    %1049 = vsyncpa [#allocation3], 1
    %1050 = vsyncpa [#allocation6], 1
    %1051 = vsyncpa [#allocation9], 1
    %1052 = vsyncpa [#allocation4], 1

// kernel: tpu_custom_call.1
$region0: #{tpu_custom_call.1}
  #allocation0 [shape = 'u32[]', space=smem, size = 0x4, offset = 0x4, fixed_abs, tag = 'smem constant byte address 0x4 - core index']
  #allocation1 [shape = 'u32[72,128]{1,0:T(1,128)}', space=vmem, size = 0x9000, scoped, tag = 'internal scratch']
  %s0 = inlined_call_operand.vmem [shape: f32[8,4,256], index: 0, kind: input, shape index: {}]
  %s1 = inlined_call_operand.vmem [shape: bf16[32,128], index: 1, kind: input, shape index: {}]
  %s2 = inlined_call_operand.hbm [shape: bf16[4,512], index: 2, kind: input, shape index: {}]
  %s3 = inlined_call_operand.hbm [shape: f32[1,512], index: 3, kind: input, shape index: {}]
  %s4 = inlined_call_operand.hbm [shape: bf16[512,128], index: 4, kind: input, shape index: {}]
  %s5 = inlined_call_operand.hbm [shape: f32[1,128], index: 5, kind: input, shape index: {}]
  %s6 = inlined_call_operand.vmem [shape: bf16[128,160], index: 6, kind: input, shape index: {}]
  %s7 = inlined_call_operand.vmem [shape: f32[1,160], index: 7, kind: input, shape index: {}]
  %s8 = inlined_call_operand.vmem [shape: bf16[128,128], index: 8, kind: input, shape index: {}]
  %s9 = inlined_call_operand.vmem [shape: f32[1,128], index: 9, kind: input, shape index: {}]
  %s10 = inlined_call_operand.vmem [shape: bf16[128,128], index: 10, kind: input, shape index: {}]
  %s11 = inlined_call_operand.vmem [shape: f32[1,128], index: 11, kind: input, shape index: {}]
  %s12 = inlined_call_operand.hbm [shape: f32[8,384], index: 12, kind: output, shape index: {}]
  %s13 = sld [smem:[#allocation0]]
  $region74: #{tpu_custom_call.1} parent=0
    _
  %s15 = ssub.s32 1, %s13
  %s16 = scalar_select 0, %s15, %s13
  $region1: #{tpu_custom_call.1} parent=0
    #allocation2 [shape = 'u8[4096]{0}', space=vmem, size = 0x1000, scoped, tag = 'input window, operand 2, single buffered']
    #allocation3 [shape = 's32[1]{0}', space=sflag, size = 0x4, scoped, tag = 'scoped memory for tpu_custom_call.1']
    #allocation4 [shape = 's32[1]{0}', space=sflag, size = 0x4, scoped, tag = 'scoped memory for tpu_custom_call.1']
    #allocation5 [shape = 'u8[2048]{0}', space=vmem, size = 0x800, scoped, tag = 'input window, operand 3, single buffered']
    #allocation6 [shape = 's32[1]{0}', space=sflag, size = 0x4, scoped, tag = 'scoped memory for tpu_custom_call.1']
    #allocation7 [shape = 'u8[131072]{0}', space=vmem, size = 0x20000, scoped, tag = 'input window, operand 4, single buffered']
    #allocation8 [shape = 'u8[512]{0}', space=vmem, size = 0x400, scoped, tag = 'input window, operand 5, single buffered']
    #allocation9 [shape = 's32[1]{0}', space=sflag, size = 0x4, scoped, tag = 'scoped memory for tpu_custom_call.1']
    #allocation10 [shape = 'u8[12288]{0}', space=vmem, size = 0x3000, scoped, tag = 'output window, operand 0, single buffered']
    %17 = vsyncpa [#allocation3], 0
    %18 = vsyncpa [#allocation6], 0
    %19 = vsyncpa [#allocation9], 0
    %20 = vsyncpa [#allocation4], 0
    // Predicated region
    $region2: #{tpu_custom_call.1} parent=1 // pred_check
      _
    $region3: #{tpu_custom_call.1} parent=1 // pred_check_branch
      %22 = sbr.rel (0) target = $region5
    $region4: #{tpu_custom_call.1} parent=1 // pred_region
      _
    $region5: #{tpu_custom_call.1} parent=1 // pred_fallthru
      _
    // Predicated region
    $region6: #{tpu_custom_call.1} parent=1 // pred_check
      _
    $region7: #{tpu_custom_call.1} parent=1 // pred_check_branch
      %24 = sbr.rel (0) target = $region9
    $region8: #{tpu_custom_call.1} parent=1 // pred_region
      _
    $region9: #{tpu_custom_call.1} parent=1 // pred_fallthru
      _
    // Predicated region
    $region10: #{tpu_custom_call.1} parent=1 // pred_check
      _
    $region11: #{tpu_custom_call.1} parent=1 // pred_check_branch
      %26 = sbr.rel (0) target = $region13
    $region12: #{tpu_custom_call.1} parent=1 // pred_region
      %28 = vsyncadd [#allocation3], 0
      %s30 = sshll.u32 %s2, 4
      %s31 = int_to_ptr.hbm [resolvable:$true] %s30
      %s32 = sshll.u32 [#allocation2], 4
      %s33 = int_to_ptr.vmem [resolvable:$true] %s32
      %35 = dma.hbm_to_vmem [thread:$0]  %s31, 128, %s33, [#allocation3]
    $region13: #{tpu_custom_call.1} parent=1 // pred_fallthru
      _
    // Predicated region
    $region14: #{tpu_custom_call.1} parent=1 // pred_check
      _
    $region15: #{tpu_custom_call.1} parent=1 // pred_check_branch
      %37 = sbr.rel (0) target = $region17
    $region16: #{tpu_custom_call.1} parent=1 // pred_region
      %39 = vsyncadd [#allocation6], 0
      %s41 = sshll.u32 %s3, 4
      %s42 = int_to_ptr.hbm [resolvable:$true] %s41
      %s43 = sshll.u32 [#allocation5], 4
      %s44 = int_to_ptr.vmem [resolvable:$true] %s43
      %46 = dma.hbm_to_vmem [thread:$0]  %s42, 64, %s44, [#allocation6]
    $region17: #{tpu_custom_call.1} parent=1 // pred_fallthru
      _
    // Predicated region
    $region18: #{tpu_custom_call.1} parent=1 // pred_check
      _
    $region19: #{tpu_custom_call.1} parent=1 // pred_check_branch
      %48 = sbr.rel (0) target = $region21
    $region20: #{tpu_custom_call.1} parent=1 // pred_region
      %50 = vsyncadd [#allocation6], 0
      %s51 = sshll.u32 %s4, 4
      %s52 = int_to_ptr.hbm [resolvable:$true] %s51
      %s53 = sshll.u32 [#allocation7], 4
      %s54 = int_to_ptr.vmem [resolvable:$true] %s53
      %59 = dma.hbm_to_vmem [thread:$0]  %s52, 4096, %s54, [#allocation6], 64, 64, 4
    $region21: #{tpu_custom_call.1} parent=1 // pred_fallthru
      _
    // Predicated region
    $region22: #{tpu_custom_call.1} parent=1 // pred_check
      _
    $region23: #{tpu_custom_call.1} parent=1 // pred_check_branch
      %61 = sbr.rel (0) target = $region25
    $region24: #{tpu_custom_call.1} parent=1 // pred_region
      %63 = vsyncadd [#allocation9], 0
      %s65 = sshll.u32 %s5, 4
      %s66 = int_to_ptr.hbm [resolvable:$true] %s65
      %s67 = sshll.u32 [#allocation8], 4
      %s68 = int_to_ptr.vmem [resolvable:$true] %s67
      %70 = dma.hbm_to_vmem [thread:$0]  %s66, 16, %s68, [#allocation9]
    $region25: #{tpu_custom_call.1} parent=1 // pred_fallthru
      _
    // Predicated region
    $region26: #{tpu_custom_call.1} parent=1 // pred_check
      _
    $region27: #{tpu_custom_call.1} parent=1 // pred_check_branch
      %72 = sbr.rel (0) target = $region29
    $region28: #{tpu_custom_call.1} parent=1 // pred_region
      _
    $region29: #{tpu_custom_call.1} parent=1 // pred_fallthru
      _
    // Predicated region
    $region30: #{tpu_custom_call.1} parent=1 // pred_check
      _
    $region31: #{tpu_custom_call.1} parent=1 // pred_check_branch
      %74 = sbr.rel (0) target = $region33
    $region32: #{tpu_custom_call.1} parent=1 // pred_region
      _
    $region33: #{tpu_custom_call.1} parent=1 // pred_fallthru
      _
    // Predicated region
    $region34: #{tpu_custom_call.1} parent=1 // pred_check
      _
    $region35: #{tpu_custom_call.1} parent=1 // pred_check_branch
      %76 = sbr.rel (0) target = $region37
    $region36: #{tpu_custom_call.1} parent=1 // pred_region
      _
    $region37: #{tpu_custom_call.1} parent=1 // pred_fallthru
      _
    // Predicated region
    $region38: #{tpu_custom_call.1} parent=1 // pred_check
      _
    $region39: #{tpu_custom_call.1} parent=1 // pred_check_branch
      %78 = sbr.rel (0) target = $region41
    $region40: #{tpu_custom_call.1} parent=1 // pred_region
      _
    $region41: #{tpu_custom_call.1} parent=1 // pred_fallthru
      _
    // Predicated region
    $region42: #{tpu_custom_call.1} parent=1 // pred_check
      _
    $region43: #{tpu_custom_call.1} parent=1 // pred_check_branch
      %80 = sbr.rel (0) target = $region45
    $region44: #{tpu_custom_call.1} parent=1 // pred_region
      _
    $region45: #{tpu_custom_call.1} parent=1 // pred_fallthru
      _
    // Predicated region
    $region46: #{tpu_custom_call.1} parent=1 // pred_check
      _
    $region47: #{tpu_custom_call.1} parent=1 // pred_check_branch
      %82 = sbr.rel (0) target = $region49
    $region48: #{tpu_custom_call.1} parent=1 // pred_region
      _
    $region49: #{tpu_custom_call.1} parent=1 // pred_fallthru
      _
    // Predicated region
    $region50: #{tpu_custom_call.1} parent=1 // pred_check
      _
    $region51: #{tpu_custom_call.1} parent=1 // pred_check_branch
      %84 = sbr.rel (0) target = $region53
    $region52: #{tpu_custom_call.1} parent=1 // pred_region
      %86 = dma.done [#allocation3], 128
    $region53: #{tpu_custom_call.1} parent=1 // pred_fallthru
      _
    // Predicated region
    $region54: #{tpu_custom_call.1} parent=1 // pred_check
      _
    $region55: #{tpu_custom_call.1} parent=1 // pred_check_branch
      %88 = sbr.rel (0) target = $region57
    $region56: #{tpu_custom_call.1} parent=1 // pred_region
      %90 = dma.done [#allocation6], 64
    $region57: #{tpu_custom_call.1} parent=1 // pred_fallthru
      _
    // Predicated region
    $region58: #{tpu_custom_call.1} parent=1 // pred_check
      _
    $region59: #{tpu_custom_call.1} parent=1 // pred_check_branch
      %92 = sbr.rel (0) target = $region61
    $region60: #{tpu_custom_call.1} parent=1 // pred_region
      %94 = dma.done [#allocation6], 4096
    $region61: #{tpu_custom_call.1} parent=1 // pred_fallthru
      _
    // Predicated region
    $region62: #{tpu_custom_call.1} parent=1 // pred_check
      _
    $region63: #{tpu_custom_call.1} parent=1 // pred_check_branch
      %96 = sbr.rel (0) target = $region65
    $region64: #{tpu_custom_call.1} parent=1 // pred_region
      %98 = dma.done [#allocation9], 16
    $region65: #{tpu_custom_call.1} parent=1 // pred_fallthru
      _
    %v100 = vld [vmem:[%s0] sm:$0xff]
    %v101 = vld [vmem:[%s0 + $0x8] sm:$0xff]
    %v102 = vld [vmem:[%s0 + $0x10] sm:$0xff]
    %v103 = vld [vmem:[%s0 + $0x18] sm:$0xff]
    %v104 = vld [vmem:[%s0 + $0x20] sm:$0xff]
    %v105 = vld [vmem:[%s0 + $0x28] sm:$0xff]
    %v106 = vld [vmem:[%s0 + $0x30] sm:$0xff]
    %v107 = vld [vmem:[%s0 + $0x38] sm:$0xff]
    %116 = vst [vmem:[#allocation1] ss:$2 sm:$0xff] %v100
    %v117 = vld.sshfl [vmem:[#allocation1] sm:$0xff pattern:$0x75316420]
    %v118 = vld.sshfl [vmem:[#allocation1 + $0x8] sm:$0xff pattern:$0x75316420]
    %s119 = scalar_lea.vmem [#allocation1], 16
    %120 = vst [vmem:[%s119] ss:$2 sm:$0xff] %v101
    %v121 = vld.sshfl [vmem:[#allocation1 + $0x10] sm:$0xff pattern:$0x75316420]
    %v122 = vld.sshfl [vmem:[#allocation1 + $0x18] sm:$0xff pattern:$0x75316420]
    %s123 = scalar_lea.vmem [#allocation1], 32
    %124 = vst [vmem:[%s123] ss:$2 sm:$0xff] %v102
    %v125 = vld.sshfl [vmem:[#allocation1 + $0x20] sm:$0xff pattern:$0x75316420]
    %v126 = vld.sshfl [vmem:[#allocation1 + $0x28] sm:$0xff pattern:$0x75316420]
    %s127 = scalar_lea.vmem [#allocation1], 48
    %128 = vst [vmem:[%s127] ss:$2 sm:$0xff] %v103
    %v129 = vld.sshfl [vmem:[#allocation1 + $0x30] sm:$0xff pattern:$0x75316420]
    %v130 = vld.sshfl [vmem:[#allocation1 + $0x38] sm:$0xff pattern:$0x75316420]
    %131 = vst [vmem:[#allocation1] ss:$2 sm:$0xff] %v104
    %v132 = vld.sshfl [vmem:[#allocation1] sm:$0xff pattern:$0x75316420]
    %v133 = vld.sshfl [vmem:[#allocation1 + $0x8] sm:$0xff pattern:$0x75316420]
    %134 = vst [vmem:[%s119] ss:$2 sm:$0xff] %v105
    %v135 = vld.sshfl [vmem:[#allocation1 + $0x10] sm:$0xff pattern:$0x75316420]
    %v136 = vld.sshfl [vmem:[#allocation1 + $0x18] sm:$0xff pattern:$0x75316420]
    %137 = vst [vmem:[%s123] ss:$2 sm:$0xff] %v106
    %v138 = vld.sshfl [vmem:[#allocation1 + $0x20] sm:$0xff pattern:$0x75316420]
    %v139 = vld.sshfl [vmem:[#allocation1 + $0x28] sm:$0xff pattern:$0x75316420]
    %140 = vst [vmem:[%s127] ss:$2 sm:$0xff] %v107
    %v141 = vld.sshfl [vmem:[#allocation1 + $0x30] sm:$0xff pattern:$0x75316420]
    %v142 = vld.sshfl [vmem:[#allocation1 + $0x38] sm:$0xff pattern:$0x75316420]
    %vm159 = vcmask 1043456
    %v160 = vsel %vm159, %v117, 0.0
    %v161 = vsel %vm159, %v118, 0.0
    %v162 = vadd.f32 %v160, %v161
    %163 = vadd.xlane.f32.xlu0 %v162
    %v164 = vpop.xlane.xlu0 %163
    %v165 = vsel %vm159, %v121, 0.0
    %v166 = vsel %vm159, %v122, 0.0
    %v167 = vadd.f32 %v165, %v166
    %168 = vadd.xlane.f32.xlu0 %v167
    %v169 = vpop.xlane.xlu0 %168
    %v170 = vsel %vm159, %v125, 0.0
    %v171 = vsel %vm159, %v126, 0.0
    %v172 = vadd.f32 %v170, %v171
    %173 = vadd.xlane.f32.xlu0 %v172
    %v174 = vpop.xlane.xlu0 %173
    %v175 = vsel %vm159, %v129, 0.0
    %v176 = vsel %vm159, %v130, 0.0
    %v177 = vadd.f32 %v175, %v176
    %178 = vadd.xlane.f32.xlu0 %v177
    %v179 = vpop.xlane.xlu0 %178
    %v180 = vsel %vm159, %v132, 0.0
    %v181 = vsel %vm159, %v133, 0.0
    %v182 = vadd.f32 %v180, %v181
    %183 = vadd.xlane.f32.xlu0 %v182
    %v184 = vpop.xlane.xlu0 %183
    %v185 = vsel %vm159, %v135, 0.0
    %v186 = vsel %vm159, %v136, 0.0
    %v187 = vadd.f32 %v185, %v186
    %188 = vadd.xlane.f32.xlu0 %v187
    %v189 = vpop.xlane.xlu0 %188
    %v190 = vsel %vm159, %v138, 0.0
    %v191 = vsel %vm159, %v139, 0.0
    %v192 = vadd.f32 %v190, %v191
    %193 = vadd.xlane.f32.xlu0 %v192
    %v194 = vpop.xlane.xlu0 %193
    %v195 = vsel %vm159, %v141, 0.0
    %v196 = vsel %vm159, %v142, 0.0
    %v197 = vadd.f32 %v195, %v196
    %198 = vadd.xlane.f32.xlu0 %v197
    %v199 = vpop.xlane.xlu0 %198
    %v200 = vrcp.pop 256.0
    %v201 = vmul.f32 256.0, %v200
    %v202 = vsub.f32 1.0, %v201
    %v203 = vmul.f32 %v200, %v202
    %v204 = vadd.f32 %v200, %v203
    %vm205 = vweird.f32 %v200
    %v206 = vsel %vm205, %v200, %v204
    %v207 = vmul.f32 %v164, %v206
    %v208 = vmul.f32 %v169, %v206
    %v209 = vmul.f32 %v174, %v206
    %v210 = vmul.f32 %v179, %v206
    %v211 = vmul.f32 %v184, %v206
    %v212 = vmul.f32 %v189, %v206
    %v213 = vmul.f32 %v194, %v206
    %v214 = vmul.f32 %v199, %v206
    %v215 = vpack.c.bf16 %v207, %v207
    %v216 = vpack.c.bf16 %v208, %v208
    %v217 = vpack.c.bf16 %v209, %v209
    %v218 = vpack.c.bf16 %v210, %v210
    %v219 = vpack.c.bf16 %v211, %v211
    %v220 = vpack.c.bf16 %v212, %v212
    %v221 = vpack.c.bf16 %v213, %v213
    %v222 = vpack.c.bf16 %v214, %v214
    %v223 = vld [vmem:[#allocation2] sm:$0xff]
    %v224 = vld [vmem:[#allocation5] sm:$0xf]
    %v226 = vperm.slane %v224, 0
    %v227 = vperm.slane %v224, 1
    %v228 = vperm.slane %v224, 2
    %v229 = vperm.slane %v224, 3
    %v242 = vunpack.c.l.b16 %v215
    %v243 = vunpack.c.l.b16 %v216
    %v244 = vunpack.c.l.b16 %v217
    %v245 = vunpack.c.l.b16 %v218
    %v246 = vunpack.c.l.b16 %v219
    %v247 = vunpack.c.l.b16 %v220
    %v248 = vunpack.c.l.b16 %v221
    %v249 = vunpack.c.l.b16 %v222
    %v250 = vlaneseq
    %v251 = vand.u32 %v250, 127
    %v252 = vperm.slane %v242, %v251
    %v253 = vperm.slane %v243, %v251
    %v254 = vperm.slane %v244, %v251
    %v255 = vperm.slane %v245, %v251
    %v256 = vperm.slane %v246, %v251
    %v257 = vperm.slane %v247, %v251
    %v258 = vperm.slane %v248, %v251
    %v259 = vperm.slane %v249, %v251
    %vm260 = vcmask 1041409
    %v261 = vsel %vm260, %v253, %v252
    %vm262 = vcmask 1042434
    %v263 = vsel %vm262, %v254, %v261
    %vm264 = vcmask 1043459
    %v265 = vsel %vm264, %v255, %v263
    %vm266 = vcmask 1044484
    %v267 = vsel %vm266, %v256, %v265
    %vm268 = vcmask 1045509
    %v269 = vsel %vm268, %v257, %v267
    %vm270 = vcmask 1046534
    %v271 = vsel %vm270, %v258, %v269
    %vm272 = vcmask 1047559
    %v273 = vsel %vm272, %v259, %v271
    %v274 = vpack.c.b16 %v273, %v273
    %276 = vst [vmem:[#allocation1] ss:$4 sm:$0xff] %v223
    %v277 = vld.sshfl [vmem:[#allocation1] sm:$0xff pattern:$0x73625140]
    %v278 = vld.sshfl [vmem:[#allocation1 + $0x8] sm:$0xff pattern:$0x73625140]
    %v279 = vld.sshfl [vmem:[#allocation1 + $0x10] sm:$0xff pattern:$0x73625140]
    %v280 = vld.sshfl [vmem:[#allocation1 + $0x18] sm:$0xff pattern:$0x73625140]
    %vm281 = vcmask 31744
    %v283 = vsel %vm281, %v274, 0
    %vm285 = vcmask 1041408
    %v286 = vsel %vm285, %v277, 0
    %v288 = vsel %vm285, %v278, 0
    %v290 = vsel %vm285, %v279, 0
    %v292 = vsel %vm285, %v280, 0
    %294 = vmatpush.bf16.msra.mxu0 0
    %295 = vmatpush.bf16.msra.mxu0 0
    %296 = vmatpush.bf16.msra.mxu0 0
    %297 = vmatpush.bf16.msra.mxu0 0
    %298 = vmatpush.bf16.msra.mxu0 0
    %299 = vmatpush.bf16.msra.mxu0 0
    %300 = vmatpush.bf16.msra.mxu0 0
    %301 = vmatpush.bf16.msra.mxu0 %v286
    %302 = vmatmul.bf16.gmra.mxu0 %v283
    %v303 = vpop.f32.mrf.mxu0
    %v304 = vadd.f32 %v226, %v303
    %v305 = vpop.f32.mrf.mxu0
    %306 = vdwg.mxu0
    %307 = vmatpush.bf16.msra.mxu0 0
    %308 = vmatpush.bf16.msra.mxu0 0
    %309 = vmatpush.bf16.msra.mxu0 0
    %310 = vmatpush.bf16.msra.mxu0 0
    %311 = vmatpush.bf16.msra.mxu0 0
    %312 = vmatpush.bf16.msra.mxu0 0
    %313 = vmatpush.bf16.msra.mxu0 0
    %314 = vmatpush.bf16.msra.mxu0 %v288
    %315 = vmatmul.bf16.gmra.mxu0 %v283
    %v316 = vpop.f32.mrf.mxu0
    %v317 = vadd.f32 %v227, %v316
    %v318 = vpop.f32.mrf.mxu0
    %319 = vdwg.mxu0
    %320 = vmatpush.bf16.msra.mxu0 0
    %321 = vmatpush.bf16.msra.mxu0 0
    %322 = vmatpush.bf16.msra.mxu0 0
    %323 = vmatpush.bf16.msra.mxu0 0
    %324 = vmatpush.bf16.msra.mxu0 0
    %325 = vmatpush.bf16.msra.mxu0 0
    %326 = vmatpush.bf16.msra.mxu0 0
    %327 = vmatpush.bf16.msra.mxu0 %v290
    %328 = vmatmul.bf16.gmra.mxu0 %v283
    %v329 = vpop.f32.mrf.mxu0
    %v330 = vadd.f32 %v228, %v329
    %v331 = vpop.f32.mrf.mxu0
    %332 = vdwg.mxu0
    %333 = vmatpush.bf16.msra.mxu0 0
    %334 = vmatpush.bf16.msra.mxu0 0
    %335 = vmatpush.bf16.msra.mxu0 0
    %336 = vmatpush.bf16.msra.mxu0 0
    %337 = vmatpush.bf16.msra.mxu0 0
    %338 = vmatpush.bf16.msra.mxu0 0
    %339 = vmatpush.bf16.msra.mxu0 0
    %340 = vmatpush.bf16.msra.mxu0 %v292
    %341 = vmatmul.bf16.gmra.mxu0 %v283
    %v342 = vpop.f32.mrf.mxu0
    %v343 = vadd.f32 %v229, %v342
    %v344 = vpop.f32.mrf.mxu0
    %345 = vdwg.mxu0
    %v346 = vmax.f32 %v304, 0.0
    %v347 = vmax.f32 %v317, 0.0
    %v348 = vmax.f32 %v330, 0.0
    %v349 = vmax.f32 %v343, 0.0
    %v350 = vpack.c.bf16 %v346, %v346
    %v351 = vpack.c.bf16 %v347, %v347
    %v352 = vpack.c.bf16 %v348, %v348
    %v353 = vpack.c.bf16 %v349, %v349
    %v354 = vld [vmem:[#allocation7] sm:$0xf]
    %v355 = vld [vmem:[#allocation7 + $0x4] sm:$0xf]
    %v356 = vld [vmem:[#allocation7 + $0x8] sm:$0xf]
    %v357 = vld [vmem:[#allocation7 + $0xc] sm:$0xf]
    %v358 = vld [vmem:[#allocation7 + $0x10] sm:$0xf]
    %v359 = vld [vmem:[#allocation7 + $0x14] sm:$0xf]
    %v360 = vld [vmem:[#allocation7 + $0x18] sm:$0xf]
    %v361 = vld [vmem:[#allocation7 + $0x1c] sm:$0xf]
    %v362 = vld [vmem:[#allocation7 + $0x20] sm:$0xf]
    %v363 = vld [vmem:[#allocation7 + $0x24] sm:$0xf]
    %v364 = vld [vmem:[#allocation7 + $0x28] sm:$0xf]
    %v365 = vld [vmem:[#allocation7 + $0x2c] sm:$0xf]
    %v366 = vld [vmem:[#allocation7 + $0x30] sm:$0xf]
    %v367 = vld [vmem:[#allocation7 + $0x34] sm:$0xf]
    %v368 = vld [vmem:[#allocation7 + $0x38] sm:$0xf]
    %v369 = vld [vmem:[#allocation7 + $0x3c] sm:$0xf]
    %v370 = vld [vmem:[#allocation7 + $0x40] sm:$0xf]
    %v371 = vld [vmem:[#allocation7 + $0x44] sm:$0xf]
    %v372 = vld [vmem:[#allocation7 + $0x48] sm:$0xf]
    %v373 = vld [vmem:[#allocation7 + $0x4c] sm:$0xf]
    %v374 = vld [vmem:[#allocation7 + $0x50] sm:$0xf]
    %v375 = vld [vmem:[#allocation7 + $0x54] sm:$0xf]
    %v376 = vld [vmem:[#allocation7 + $0x58] sm:$0xf]
    %v377 = vld [vmem:[#allocation7 + $0x5c] sm:$0xf]
    %v378 = vld [vmem:[#allocation7 + $0x60] sm:$0xf]
    %v379 = vld [vmem:[#allocation7 + $0x64] sm:$0xf]
    %v380 = vld [vmem:[#allocation7 + $0x68] sm:$0xf]
    %v381 = vld [vmem:[#allocation7 + $0x6c] sm:$0xf]
    %v382 = vld [vmem:[#allocation7 + $0x70] sm:$0xf]
    %v383 = vld [vmem:[#allocation7 + $0x74] sm:$0xf]
    %v384 = vld [vmem:[#allocation7 + $0x78] sm:$0xf]
    %v385 = vld [vmem:[#allocation7 + $0x7c] sm:$0xf]
    %v386 = vld [vmem:[#allocation7 + $0x80] sm:$0xf]
    %v387 = vld [vmem:[#allocation7 + $0x84] sm:$0xf]
    %v388 = vld [vmem:[#allocation7 + $0x88] sm:$0xf]
    %v389 = vld [vmem:[#allocation7 + $0x8c] sm:$0xf]
    %v390 = vld [vmem:[#allocation7 + $0x90] sm:$0xf]
    %v391 = vld [vmem:[#allocation7 + $0x94] sm:$0xf]
    %v392 = vld [vmem:[#allocation7 + $0x98] sm:$0xf]
    %v393 = vld [vmem:[#allocation7 + $0x9c] sm:$0xf]
    %v394 = vld [vmem:[#allocation7 + $0xa0] sm:$0xf]
    %v395 = vld [vmem:[#allocation7 + $0xa4] sm:$0xf]
    %v396 = vld [vmem:[#allocation7 + $0xa8] sm:$0xf]
    %v397 = vld [vmem:[#allocation7 + $0xac] sm:$0xf]
    %v398 = vld [vmem:[#allocation7 + $0xb0] sm:$0xf]
    %v399 = vld [vmem:[#allocation7 + $0xb4] sm:$0xf]
    %v400 = vld [vmem:[#allocation7 + $0xb8] sm:$0xf]
    %v401 = vld [vmem:[#allocation7 + $0xbc] sm:$0xf]
    %v402 = vld [vmem:[#allocation7 + $0xc0] sm:$0xf]
    %v403 = vld [vmem:[#allocation7 + $0xc4] sm:$0xf]
    %v404 = vld [vmem:[#allocation7 + $0xc8] sm:$0xf]
    %v405 = vld [vmem:[#allocation7 + $0xcc] sm:$0xf]
    %v406 = vld [vmem:[#allocation7 + $0xd0] sm:$0xf]
    %v407 = vld [vmem:[#allocation7 + $0xd4] sm:$0xf]
    %v408 = vld [vmem:[#allocation7 + $0xd8] sm:$0xf]
    %v409 = vld [vmem:[#allocation7 + $0xdc] sm:$0xf]
    %v410 = vld [vmem:[#allocation7 + $0xe0] sm:$0xf]
    %v411 = vld [vmem:[#allocation7 + $0xe4] sm:$0xf]
    %v412 = vld [vmem:[#allocation7 + $0xe8] sm:$0xf]
    %v413 = vld [vmem:[#allocation7 + $0xec] sm:$0xf]
    %v414 = vld [vmem:[#allocation7 + $0xf0] sm:$0xf]
    %v415 = vld [vmem:[#allocation7 + $0xf4] sm:$0xf]
    %v416 = vld [vmem:[#allocation7 + $0xf8] sm:$0xf]
    %v417 = vld [vmem:[#allocation7 + $0xfc] sm:$0xf]
    %v418 = vld [vmem:[#allocation8] sm:$0x1]
    %v420 = vperm.slane %v418, 0
    %v486 = vunpack.c.l.b16 %v354
    %v487 = vunpack.c.l.b16 %v355
    %v488 = vunpack.c.l.b16 %v356
    %v489 = vunpack.c.l.b16 %v357
    %v490 = vunpack.c.l.b16 %v358
    %v491 = vunpack.c.l.b16 %v359
    %v492 = vunpack.c.l.b16 %v360
    %v493 = vunpack.c.l.b16 %v361
    %v494 = vunpack.c.l.b16 %v362
    %v495 = vunpack.c.l.b16 %v363
    %v496 = vunpack.c.l.b16 %v364
    %v497 = vunpack.c.l.b16 %v365
    %v498 = vunpack.c.l.b16 %v366
    %v499 = vunpack.c.l.b16 %v367
    %v500 = vunpack.c.l.b16 %v368
    %v501 = vunpack.c.l.b16 %v369
    %v502 = vunpack.c.l.b16 %v370
    %v503 = vunpack.c.l.b16 %v371
    %v504 = vunpack.c.l.b16 %v372
    %v505 = vunpack.c.l.b16 %v373
    %v506 = vunpack.c.l.b16 %v374
    %v507 = vunpack.c.l.b16 %v375
    %v508 = vunpack.c.l.b16 %v376
    %v509 = vunpack.c.l.b16 %v377
    %v510 = vunpack.c.l.b16 %v378
    %v511 = vunpack.c.l.b16 %v379
    %v512 = vunpack.c.l.b16 %v380
    %v513 = vunpack.c.l.b16 %v381
    %v514 = vunpack.c.l.b16 %v382
    %v515 = vunpack.c.l.b16 %v383
    %v516 = vunpack.c.l.b16 %v384
    %v517 = vunpack.c.l.b16 %v385
    %v518 = vunpack.c.l.b16 %v386
    %v519 = vunpack.c.l.b16 %v387
    %v520 = vunpack.c.l.b16 %v388
    %v521 = vunpack.c.l.b16 %v389
    %v522 = vunpack.c.l.b16 %v390
    %v523 = vunpack.c.l.b16 %v391
    %v524 = vunpack.c.l.b16 %v392
    %v525 = vunpack.c.l.b16 %v393
    %v526 = vunpack.c.l.b16 %v394
    %v527 = vunpack.c.l.b16 %v395
    %v528 = vunpack.c.l.b16 %v396
    %v529 = vunpack.c.l.b16 %v397
    %v530 = vunpack.c.l.b16 %v398
    %v531 = vunpack.c.l.b16 %v399
    %v532 = vunpack.c.l.b16 %v400
    %v533 = vunpack.c.l.b16 %v401
    %v534 = vunpack.c.l.b16 %v402
    %v535 = vunpack.c.l.b16 %v403
    %v536 = vunpack.c.l.b16 %v404
    %v537 = vunpack.c.l.b16 %v405
    %v538 = vunpack.c.l.b16 %v406
    %v539 = vunpack.c.l.b16 %v407
    %v540 = vunpack.c.l.b16 %v408
    %v541 = vunpack.c.l.b16 %v409
    %v542 = vunpack.c.l.b16 %v410
    %v543 = vunpack.c.l.b16 %v411
    %v544 = vunpack.c.l.b16 %v412
    %v545 = vunpack.c.l.b16 %v413
    %v546 = vunpack.c.l.b16 %v414
    %v547 = vunpack.c.l.b16 %v415
    %v548 = vunpack.c.l.b16 %v416
    %v549 = vunpack.c.l.b16 %v417
    %v550 = vpack.c.b16 %v487, %v486
    %v551 = vpack.c.b16 %v489, %v488
    %v552 = vpack.c.b16 %v491, %v490
    %v553 = vpack.c.b16 %v493, %v492
    %v554 = vpack.c.b16 %v495, %v494
    %v555 = vpack.c.b16 %v497, %v496
    %v556 = vpack.c.b16 %v499, %v498
    %v557 = vpack.c.b16 %v501, %v500
    %v558 = vpack.c.b16 %v503, %v502
    %v559 = vpack.c.b16 %v505, %v504
    %v560 = vpack.c.b16 %v507, %v506
    %v561 = vpack.c.b16 %v509, %v508
    %v562 = vpack.c.b16 %v511, %v510
    %v563 = vpack.c.b16 %v513, %v512
    %v564 = vpack.c.b16 %v515, %v514
    %v565 = vpack.c.b16 %v517, %v516
    %v566 = vpack.c.b16 %v519, %v518
    %v567 = vpack.c.b16 %v521, %v520
    %v568 = vpack.c.b16 %v523, %v522
    %v569 = vpack.c.b16 %v525, %v524
    %v570 = vpack.c.b16 %v527, %v526
    %v571 = vpack.c.b16 %v529, %v528
    %v572 = vpack.c.b16 %v531, %v530
    %v573 = vpack.c.b16 %v533, %v532
    %v574 = vpack.c.b16 %v535, %v534
    %v575 = vpack.c.b16 %v537, %v536
    %v576 = vpack.c.b16 %v539, %v538
    %v577 = vpack.c.b16 %v541, %v540
    %v578 = vpack.c.b16 %v543, %v542
    %v579 = vpack.c.b16 %v545, %v544
    %v580 = vpack.c.b16 %v547, %v546
    %v581 = vpack.c.b16 %v549, %v548
    %614 = vmatpush.bf16.msra.mxu0 %v557
    %615 = vmatpush.bf16.msra.mxu0 %v556
    %616 = vmatpush.bf16.msra.mxu0 %v555
    %617 = vmatpush.bf16.msra.mxu0 %v554
    %618 = vmatpush.bf16.msra.mxu0 %v553
    %619 = vmatpush.bf16.msra.mxu0 %v552
    %620 = vmatpush.bf16.msra.mxu0 %v551
    %621 = vmatpush.bf16.msra.mxu0 %v550
    %622 = vmatmul.bf16.gmra.mxu0 %v350
    %v623 = vpop.f32.mrf.mxu0
    %v624 = vadd.f32 %v420, %v623
    %v625 = vpop.f32.mrf.mxu0
    %626 = vdwg.mxu0
    %627 = vmatpush.bf16.msra.mxu0 %v565
    %628 = vmatpush.bf16.msra.mxu0 %v564
    %629 = vmatpush.bf16.msra.mxu0 %v563
    %630 = vmatpush.bf16.msra.mxu0 %v562
    %631 = vmatpush.bf16.msra.mxu0 %v561
    %632 = vmatpush.bf16.msra.mxu0 %v560
    %633 = vmatpush.bf16.msra.mxu0 %v559
    %634 = vmatpush.bf16.msra.mxu0 %v558
    %635 = vmatmul.bf16.gmra.mxu0 %v351
    %v636 = vpop.f32.mrf.mxu0
    %v637 = vadd.f32 %v624, %v636
    %v638 = vpop.f32.mrf.mxu0
    %639 = vdwg.mxu0
    %640 = vmatpush.bf16.msra.mxu0 %v573
    %641 = vmatpush.bf16.msra.mxu0 %v572
    %642 = vmatpush.bf16.msra.mxu0 %v571
    %643 = vmatpush.bf16.msra.mxu0 %v570
    %644 = vmatpush.bf16.msra.mxu0 %v569
    %645 = vmatpush.bf16.msra.mxu0 %v568
    %646 = vmatpush.bf16.msra.mxu0 %v567
    %647 = vmatpush.bf16.msra.mxu0 %v566
    %648 = vmatmul.bf16.gmra.mxu0 %v352
    %v649 = vpop.f32.mrf.mxu0
    %v650 = vadd.f32 %v637, %v649
    %v651 = vpop.f32.mrf.mxu0
    %652 = vdwg.mxu0
    %653 = vmatpush.bf16.msra.mxu0 %v581
    %654 = vmatpush.bf16.msra.mxu0 %v580
    %655 = vmatpush.bf16.msra.mxu0 %v579
    %656 = vmatpush.bf16.msra.mxu0 %v578
    %657 = vmatpush.bf16.msra.mxu0 %v577
    %658 = vmatpush.bf16.msra.mxu0 %v576
    %659 = vmatpush.bf16.msra.mxu0 %v575
    %660 = vmatpush.bf16.msra.mxu0 %v574
    %661 = vmatmul.bf16.gmra.mxu0 %v353
    %v662 = vpop.f32.mrf.mxu0
    %v663 = vadd.f32 %v650, %v662
    %v664 = vpop.f32.mrf.mxu0
    %665 = vdwg.mxu0
    %v666 = vmax.f32 %v663, 0.0
    %667 = vst [vmem:[#allocation10] sm:$0xff] %v666
    %v668 = vpack.c.bf16 %v666, %v666
    %v669 = vld [vmem:[%s6] sm:$0xff]
    %v670 = vld [vmem:[%s6 + $0x8] sm:$0xff]
    %v671 = vld [vmem:[%s6 + $0x10] sm:$0xff]
    %v672 = vld [vmem:[%s6 + $0x18] sm:$0xff]
    %v673 = vld [vmem:[%s6 + $0x20] sm:$0xff]
    %v674 = vld [vmem:[%s6 + $0x28] sm:$0xff]
    %v675 = vld [vmem:[%s6 + $0x30] sm:$0xff]
    %v676 = vld [vmem:[%s6 + $0x38] sm:$0xff]
    %v677 = vld [vmem:[%s6 + $0x40] sm:$0xff]
    %v678 = vld [vmem:[%s6 + $0x48] sm:$0xff]
    %v679 = vld [vmem:[%s6 + $0x50] sm:$0xff]
    %v680 = vld [vmem:[%s6 + $0x58] sm:$0xff]
    %v681 = vld [vmem:[%s6 + $0x60] sm:$0xff]
    %v682 = vld [vmem:[%s6 + $0x68] sm:$0xff]
    %v683 = vld [vmem:[%s6 + $0x70] sm:$0xff]
    %v684 = vld [vmem:[%s6 + $0x78] sm:$0xff]
    %v685 = vld [vmem:[%s7] sm:$0x3]
    %v687 = vperm.slane %v685, 0
    %v688 = vperm.slane %v685, 1
    %v707 = vunpack.c.l.b16 %v669
    %v708 = vunpack.c.h.b16 %v669
    %v709 = vunpack.c.l.b16 %v670
    %v710 = vunpack.c.h.b16 %v670
    %v711 = vunpack.c.l.b16 %v671
    %v712 = vunpack.c.h.b16 %v671
    %v713 = vunpack.c.l.b16 %v672
    %v714 = vunpack.c.h.b16 %v672
    %v715 = vunpack.c.l.b16 %v673
    %v716 = vunpack.c.h.b16 %v673
    %v717 = vunpack.c.l.b16 %v674
    %v718 = vunpack.c.h.b16 %v674
    %v719 = vunpack.c.l.b16 %v675
    %v720 = vunpack.c.h.b16 %v675
    %v721 = vunpack.c.l.b16 %v676
    %v722 = vunpack.c.h.b16 %v676
    %v723 = vunpack.c.l.b16 %v677
    %v724 = vunpack.c.h.b16 %v677
    %v725 = vunpack.c.l.b16 %v678
    %v726 = vunpack.c.h.b16 %v678
    %v727 = vunpack.c.l.b16 %v679
    %v728 = vunpack.c.h.b16 %v679
    %v729 = vunpack.c.l.b16 %v680
    %v730 = vunpack.c.h.b16 %v680
    %v731 = vunpack.c.l.b16 %v681
    %v732 = vunpack.c.h.b16 %v681
    %v733 = vunpack.c.l.b16 %v682
    %v734 = vunpack.c.h.b16 %v682
    %v735 = vunpack.c.l.b16 %v683
    %v736 = vunpack.c.h.b16 %v683
    %v737 = vunpack.c.l.b16 %v684
    %v738 = vunpack.c.h.b16 %v684
    %v739 = vpack.c.b16 %v709, %v707
    %v740 = vpack.c.b16 %v710, %v708
    %v741 = vpack.c.b16 %v713, %v711
    %v742 = vpack.c.b16 %v714, %v712
    %v743 = vpack.c.b16 %v717, %v715
    %v744 = vpack.c.b16 %v718, %v716
    %v745 = vpack.c.b16 %v721, %v719
    %v746 = vpack.c.b16 %v722, %v720
    %v747 = vpack.c.b16 %v725, %v723
    %v748 = vpack.c.b16 %v726, %v724
    %v749 = vpack.c.b16 %v729, %v727
    %v750 = vpack.c.b16 %v730, %v728
    %v751 = vpack.c.b16 %v733, %v731
    %v752 = vpack.c.b16 %v734, %v732
    %v753 = vpack.c.b16 %v737, %v735
    %v754 = vpack.c.b16 %v738, %v736
    %771 = vmatpush.bf16.msra.mxu0 %v753
    %772 = vmatpush.bf16.msra.mxu0 %v751
    %773 = vmatpush.bf16.msra.mxu0 %v749
    %774 = vmatpush.bf16.msra.mxu0 %v747
    %775 = vmatpush.bf16.msra.mxu0 %v745
    %776 = vmatpush.bf16.msra.mxu0 %v743
    %777 = vmatpush.bf16.msra.mxu0 %v741
    %778 = vmatpush.bf16.msra.mxu0 %v739
    %779 = vmatmul.bf16.gmra.mxu0 %v668
    %v780 = vpop.f32.mrf.mxu0
    %v781 = vadd.f32 %v687, %v780
    %v782 = vpop.f32.mrf.mxu0
    %783 = vdwg.mxu0
    %784 = vmatpush.bf16.msra.mxu0 %v754
    %785 = vmatpush.bf16.msra.mxu0 %v752
    %786 = vmatpush.bf16.msra.mxu0 %v750
    %787 = vmatpush.bf16.msra.mxu0 %v748
    %788 = vmatpush.bf16.msra.mxu0 %v746
    %789 = vmatpush.bf16.msra.mxu0 %v744
    %790 = vmatpush.bf16.msra.mxu0 %v742
    %791 = vmatpush.bf16.msra.mxu0 %v740
    %792 = vmatmul.bf16.gmra.mxu0 %v668
    %v793 = vpop.f32.mrf.mxu0
    %v794 = vadd.f32 %v688, %v793
    %v795 = vpop.f32.mrf.mxu0
    %796 = vdwg.mxu0
    %v797 = vtanh.pop %v781
    %vm798 = vcmask 261120
    %v799 = vsel %vm798, %v794, -inf
    %800 = vmax.xlane.f32.xlu0 %v799
    %v801 = vpop.xlane.xlu0 %800
    %v802 = vsub.f32 %v794, %v801
    %v803 = vmul.f32 %v802, 1.442695
    %v804 = vpow.pop %v803
    %v805 = vsel %vm798, %v804, 0.0
    %806 = vadd.xlane.f32.xlu0 %v805
    %v807 = vpop.xlane.xlu0 %806
    %v808 = vrcp.pop %v807
    %v809 = vmul.f32 %v804, %v808
    %v810 = vpack.c.bf16 %v809, %v809
    %v811 = vld [vmem:[%s1] sm:$0xf]
    %v812 = vld [vmem:[%s1 + $0x4] sm:$0xf]
    %v813 = vld [vmem:[%s1 + $0x8] sm:$0xf]
    %v814 = vld [vmem:[%s1 + $0xc] sm:$0xf]
    %v819 = vunpack.c.l.b16 %v811
    %v820 = vunpack.c.l.b16 %v812
    %v821 = vunpack.c.l.b16 %v813
    %v822 = vunpack.c.l.b16 %v814
    %v823 = vpack.c.b16 %v820, %v819
    %v824 = vpack.c.b16 %v822, %v821
    %v828 = vsel %vm798, %v810, 0
    %830 = vmatpush.bf16.msra.mxu0 0
    %831 = vmatpush.bf16.msra.mxu0 0
    %832 = vmatpush.bf16.msra.mxu0 0
    %833 = vmatpush.bf16.msra.mxu0 0
    %834 = vmatpush.bf16.msra.mxu0 0
    %835 = vmatpush.bf16.msra.mxu0 0
    %836 = vmatpush.bf16.msra.mxu0 %v824
    %837 = vmatpush.bf16.msra.mxu0 %v823
    %838 = vmatmul.bf16.gmra.mxu0 %v828
    %v839 = vpop.f32.mrf.mxu0
    %v840 = vadd.f32 0.0, %v839
    %v841 = vpop.f32.mrf.mxu0
    %842 = vdwg.mxu0
    %v843 = vmul.f32 %v797, %v840
    %v844 = vadd.f32 %v666, %v843
    %v845 = vpack.c.bf16 %v844, %v844
    %v846 = vld [vmem:[%s8] sm:$0xf]
    %v847 = vld [vmem:[%s8 + $0x4] sm:$0xf]
    %v848 = vld [vmem:[%s8 + $0x8] sm:$0xf]
    %v849 = vld [vmem:[%s8 + $0xc] sm:$0xf]
    %v850 = vld [vmem:[%s8 + $0x10] sm:$0xf]
    %v851 = vld [vmem:[%s8 + $0x14] sm:$0xf]
    %v852 = vld [vmem:[%s8 + $0x18] sm:$0xf]
    %v853 = vld [vmem:[%s8 + $0x1c] sm:$0xf]
    %v854 = vld [vmem:[%s8 + $0x20] sm:$0xf]
    %v855 = vld [vmem:[%s8 + $0x24] sm:$0xf]
    %v856 = vld [vmem:[%s8 + $0x28] sm:$0xf]
    %v857 = vld [vmem:[%s8 + $0x2c] sm:$0xf]
    %v858 = vld [vmem:[%s8 + $0x30] sm:$0xf]
    %v859 = vld [vmem:[%s8 + $0x34] sm:$0xf]
    %v860 = vld [vmem:[%s8 + $0x38] sm:$0xf]
    %v861 = vld [vmem:[%s8 + $0x3c] sm:$0xf]
    %v862 = vld [vmem:[%s9] sm:$0x1]
    %v864 = vperm.slane %v862, 0
    %v882 = vunpack.c.l.b16 %v846
    %v883 = vunpack.c.l.b16 %v847
    %v884 = vunpack.c.l.b16 %v848
    %v885 = vunpack.c.l.b16 %v849
    %v886 = vunpack.c.l.b16 %v850
    %v887 = vunpack.c.l.b16 %v851
    %v888 = vunpack.c.l.b16 %v852
    %v889 = vunpack.c.l.b16 %v853
    %v890 = vunpack.c.l.b16 %v854
    %v891 = vunpack.c.l.b16 %v855
    %v892 = vunpack.c.l.b16 %v856
    %v893 = vunpack.c.l.b16 %v857
    %v894 = vunpack.c.l.b16 %v858
    %v895 = vunpack.c.l.b16 %v859
    %v896 = vunpack.c.l.b16 %v860
    %v897 = vunpack.c.l.b16 %v861
    %v898 = vpack.c.b16 %v883, %v882
    %v899 = vpack.c.b16 %v885, %v884
    %v900 = vpack.c.b16 %v887, %v886
    %v901 = vpack.c.b16 %v889, %v888
    %v902 = vpack.c.b16 %v891, %v890
    %v903 = vpack.c.b16 %v893, %v892
    %v904 = vpack.c.b16 %v895, %v894
    %v905 = vpack.c.b16 %v897, %v896
    %914 = vmatpush.bf16.msra.mxu0 %v905
    %915 = vmatpush.bf16.msra.mxu0 %v904
    %916 = vmatpush.bf16.msra.mxu0 %v903
    %917 = vmatpush.bf16.msra.mxu0 %v902
    %918 = vmatpush.bf16.msra.mxu0 %v901
    %919 = vmatpush.bf16.msra.mxu0 %v900
    %920 = vmatpush.bf16.msra.mxu0 %v899
    %921 = vmatpush.bf16.msra.mxu0 %v898
    %922 = vmatmul.bf16.gmra.mxu0 %v845
    %v923 = vpop.f32.mrf.mxu0
    %v924 = vadd.f32 %v864, %v923
    %v925 = vpop.f32.mrf.mxu0
    %926 = vdwg.mxu0
    %v927 = vtanh.pop %v924
    %928 = vst [vmem:[#allocation10 + $0x8] sm:$0xff] %v927
    %v929 = vpack.c.bf16 %v927, %v927
    %v930 = vld [vmem:[%s10] sm:$0xf]
    %v931 = vld [vmem:[%s10 + $0x4] sm:$0xf]
    %v932 = vld [vmem:[%s10 + $0x8] sm:$0xf]
    %v933 = vld [vmem:[%s10 + $0xc] sm:$0xf]
    %v934 = vld [vmem:[%s10 + $0x10] sm:$0xf]
    %v935 = vld [vmem:[%s10 + $0x14] sm:$0xf]
    %v936 = vld [vmem:[%s10 + $0x18] sm:$0xf]
    %v937 = vld [vmem:[%s10 + $0x1c] sm:$0xf]
    %v938 = vld [vmem:[%s10 + $0x20] sm:$0xf]
    %v939 = vld [vmem:[%s10 + $0x24] sm:$0xf]
    %v940 = vld [vmem:[%s10 + $0x28] sm:$0xf]
    %v941 = vld [vmem:[%s10 + $0x2c] sm:$0xf]
    %v942 = vld [vmem:[%s10 + $0x30] sm:$0xf]
    %v943 = vld [vmem:[%s10 + $0x34] sm:$0xf]
    %v944 = vld [vmem:[%s10 + $0x38] sm:$0xf]
    %v945 = vld [vmem:[%s10 + $0x3c] sm:$0xf]
    %v946 = vld [vmem:[%s11] sm:$0x1]
    %v948 = vperm.slane %v946, 0
    %v966 = vunpack.c.l.b16 %v930
    %v967 = vunpack.c.l.b16 %v931
    %v968 = vunpack.c.l.b16 %v932
    %v969 = vunpack.c.l.b16 %v933
    %v970 = vunpack.c.l.b16 %v934
    %v971 = vunpack.c.l.b16 %v935
    %v972 = vunpack.c.l.b16 %v936
    %v973 = vunpack.c.l.b16 %v937
    %v974 = vunpack.c.l.b16 %v938
    %v975 = vunpack.c.l.b16 %v939
    %v976 = vunpack.c.l.b16 %v940
    %v977 = vunpack.c.l.b16 %v941
    %v978 = vunpack.c.l.b16 %v942
    %v979 = vunpack.c.l.b16 %v943
    %v980 = vunpack.c.l.b16 %v944
    %v981 = vunpack.c.l.b16 %v945
    %v982 = vpack.c.b16 %v967, %v966
    %v983 = vpack.c.b16 %v969, %v968
    %v984 = vpack.c.b16 %v971, %v970
    %v985 = vpack.c.b16 %v973, %v972
    %v986 = vpack.c.b16 %v975, %v974
    %v987 = vpack.c.b16 %v977, %v976
    %v988 = vpack.c.b16 %v979, %v978
    %v989 = vpack.c.b16 %v981, %v980
    %998 = vmatpush.bf16.msra.mxu0 %v989
    %999 = vmatpush.bf16.msra.mxu0 %v988
    %1000 = vmatpush.bf16.msra.mxu0 %v987
    %1001 = vmatpush.bf16.msra.mxu0 %v986
    %1002 = vmatpush.bf16.msra.mxu0 %v985
    %1003 = vmatpush.bf16.msra.mxu0 %v984
    %1004 = vmatpush.bf16.msra.mxu0 %v983
    %1005 = vmatpush.bf16.msra.mxu0 %v982
    %1006 = vmatmul.bf16.gmra.mxu0 %v929
    %v1007 = vpop.f32.mrf.mxu0
    %v1008 = vadd.f32 %v948, %v1007
    %v1009 = vpop.f32.mrf.mxu0
    %1010 = vdwg.mxu0
    %1011 = vmax.xlane.f32.xlu0 %v1008
    %v1012 = vpop.xlane.xlu0 %1011
    %v1013 = vsub.f32 %v1008, %v1012
    %v1014 = vmul.f32 %v1013, 1.442695
    %v1015 = vpow.pop %v1014
    %1016 = vadd.xlane.f32.xlu0 %v1015
    %v1017 = vpop.xlane.xlu0 %1016
    %v1018 = vrcp.pop %v1017
    %v1019 = vmul.f32 %v1017, %v1018
    %v1020 = vsub.f32 1.0, %v1019
    %v1021 = vmul.f32 %v1018, %v1020
    %v1022 = vadd.f32 %v1018, %v1021
    %vm1023 = vweird.f32 %v1017
    %vm1024 = vweird.f32 %v1018
    %vm1025 = vmor %vm1023, %vm1024
    %v1026 = vsel %vm1025, %v1018, %v1022
    %v1027 = vand.u32 2147483647, %v1017
    %vm1028 = vcmp.eq.f32.partialorder %v1027, 8.507059e+37
    %v1029 = vand.u32 %v1017, 2147483648
    %v1030 = vor.u32 1.1754944e-38, %v1029
    %v1031 = vsel %vm1028, %v1030, %v1026
    %v1032 = vmul.f32 %v1015, %v1031
    %1033 = vst [vmem:[#allocation10 + $0x10] sm:$0xff] %v1032
    // Predicated region
    $region66: #{tpu_custom_call.1} parent=1 // pred_check
      _
    $region67: #{tpu_custom_call.1} parent=1 // pred_check_branch
      %1035 = sbr.rel (0) target = $region69
    $region68: #{tpu_custom_call.1} parent=1 // pred_region
      %1037 = vsyncadd [#allocation4], 0
      %s1039 = sshll.u32 [#allocation10], 4
      %s1040 = int_to_ptr.vmem [resolvable:$true] %s1039
      %s1041 = sshll.u32 %s12, 4
      %s1042 = int_to_ptr.hbm [resolvable:$true] %s1041
      %1044 = dma.vmem_to_hbm [thread:$0]  %s1040, 384, %s1042, [#allocation4]
    $region69: #{tpu_custom_call.1} parent=1 // pred_fallthru
      _
    // Predicated region
    $region70: #{tpu_custom_call.1} parent=1 // pred_check
      _
    $region71: #{tpu_custom_call.1} parent=1 // pred_check_branch
      %1046 = sbr.rel (0) target = $region73
    $region72: #{tpu_custom_call.1} parent=1 // pred_region
      %1048 = dma.done [#allocation4], 384
    $region73: #{tpu_custom_call.1} parent=1 // pred_fallthru
      _
    %1049 = vsyncpa [#allocation3], 1
    %1050 = vsyncpa [#allocation6], 1
    %1051 = vsyncpa [#allocation9], 1
    %1052 = vsyncpa [#allocation4], 1

</llo_original>
